<compile_context>
chip_gen: v7x
topology: tpu7x:2x2x1
jax: 0.10.0
libtpu: 0.0.40
codegen_flags: <defaults>
</compile_context>

<pallas_src>
import jax
import jax.numpy as jnp
from jax.experimental import pallas as pl
from jax.experimental.pallas import tpu as pltpu


# --------------------------------------------------------------------------
# Kernel helpers
# --------------------------------------------------------------------------
def _lstm_activate(gates, c_prev, H, g_scale, g_off):
    """PyTorch nn.LSTMCell gate order [i | f | g | o] along the 4H lane axis.

    A single tanh over the whole (B, 4H) gates vreg implements both tanh (g
    block) and sigmoid (i/f/o blocks) via sigmoid(x) = 0.5 + 0.5*tanh(0.5*x);
    g_scale / g_off are precomputed lane-selected constants.
    """
    act = g_off + g_scale * jnp.tanh(gates * g_scale)
    i = act[:, 0:H]
    f = act[:, H:2 * H]
    g = act[:, 2 * H:3 * H]
    o = act[:, 3 * H:4 * H]
    c_new = f * c_prev + i * g
    h_new = o * jnp.tanh(c_new)
    return h_new, c_new


def _make_kernel(mm_dtype):
    def kernel(
        # data
        xt_ref, ev_ref, clip_ref, patt_ref, mask_ref, h_in_ref, c_in_ref,
        # LSTM weights (pre-transposed to (in, 4H) / (D_xt, 8H), pre-split per stream)
        w_xt01_ref, w_ev0_ref, w_hh0_ref, w_at1_ref, w_hh1_ref,
        # packed small params
        b01_ref,             # (2, 4H): row0 = b_ih0+b_hh0, row1 = b_ih1+b_hh1
        w_h2a_ref,           # (H, A)
        attp_ref,            # (3, A): row0 = b_h2a, row1 = alpha_net weight, row2 = b_alpha
        # outputs
        h_out_ref, c_out_ref, y_out_ref,
    ):
        def mm(a, w_ref):
            return jnp.dot(a.astype(mm_dtype), w_ref[...].astype(mm_dtype),
                           preferred_element_type=jnp.float32)

        H = h_in_ref.shape[2]
        A = attp_ref.shape[1]
        H4 = 4 * H

        xt = xt_ref[...]                       # (B, D_xt)
        pre_h0 = h_in_ref[0]                   # state[0][0]
        pre_h1 = h_in_ref[1]                   # state[0][1]

        # Lane-selected activation constants (built once, reused by both cells).
        lane = jax.lax.broadcasted_iota(jnp.int32, (xt.shape[0], H4), 1)
        is_g = (lane >= 2 * H) & (lane < 3 * H)
        g_scale = jnp.where(is_g, 1.0, 0.5)
        g_off = jnp.where(is_g, 0.0, 0.5)

        # xt contributes to both streams' gates -> one wide MXU matmul, then
        # lane-aligned slices (4H boundary).
        g_xt = mm(xt, w_xt01_ref)              # (B, 8H)

        # ---------- stream 0 LSTM: cat(xt, event) via split weights ----------
        g0 = (g_xt[:, :H4] + mm(ev_ref[...], w_ev0_ref)
              + mm(pre_h0, w_hh0_ref) + b01_ref[0:1, :])
        h0, c0 = _lstm_activate(g0, c_in_ref[0], H, g_scale, g_off)
        # dropout0 -> identity (inference)

        # ---------- attention over clip features (uses PREVIOUS h1) ----------
        # p_att = ctx2att(clip) is precomputed in the wrapper (batch/step invariant).
        att_h = mm(pre_h1, w_h2a_ref) + attp_ref[0:1, :]                # (B, A)
        dot3 = jnp.tanh(patt_ref[...] + att_h[:, None, :])              # (B, L, A)
        w_alpha = attp_ref[1:2, :].reshape(1, 1, A)
        scores = jnp.sum(dot3 * w_alpha, axis=-1) + attp_ref[2:3, 0:1]  # (B, L)

        # Fused masked softmax (exact for a 0/1 mask).
        # NOTE: an all-zero mask row divides by zero, same as the PyTorch reference.
        m = jnp.max(scores, axis=1, keepdims=True)
        e = jnp.exp(scores - m) * mask_ref[...]
        denom = jnp.sum(e, axis=1, keepdims=True)
        weight = e * pl.reciprocal(denom, approx=True)                  # (B, L)
        att_res = jnp.sum(weight[:, :, None] * clip_ref[...], axis=1)   # (B, C)

        # ---------- stream 1 LSTM: cat(xt, att_res) via split weights ----------
        g1 = (g_xt[:, H4:] + mm(att_res, w_at1_ref)
              + mm(pre_h1, w_hh1_ref) + b01_ref[1:2, :])
        h1, c1 = _lstm_activate(g1, c_in_ref[1], H, g_scale, g_off)
        # dropout1 -> identity (inference)

        # ---------- dense stacked state + concatenated output stores ----------
        h_out_ref[0] = h0
        h_out_ref[1] = h1
        c_out_ref[0] = c0
        c_out_ref[1] = c1
        y_out_ref[:, :H] = h0          # output = torch.cat((h0, h1), 1)
        y_out_ref[:, H:] = h1

    return kernel


# --------------------------------------------------------------------------
# Wrapper
# --------------------------------------------------------------------------
def two_stream_core(xt, video, event, clip, clip_mask, h_state, c_state, params,
                    *, matmul_dtype=jnp.float32, batch_block=None):
    """Returns (output, (h_new, c_new)) matching TwoStream_Core.forward."""
    del video  # accepted for API parity; unused by TwoStream_Core.forward

    (w_xt01, w_ev0, w_hh0, w_at1, w_hh1,
     b01, w_ctx_t, b_ctx, w_h2a_t, attp) = params

    B, L, C = clip.shape
    H = h_state.shape[2]

    # Hoisted batch/step-invariant projection (ctx2att). A decoder stepping this
    # core over time with fixed clip features should compute this once per sequence.
    p_att = jnp.einsum('blc,ca->bla', clip, w_ctx_t) + b_ctx            # (B, L, A)

    bb = B if batch_block is None else batch_block                      # batch tile
    grid = (pl.cdiv(B, bb),)

    def batched(shape):
        blk = (bb,) + tuple(shape[1:])
        nrest = len(shape) - 1
        return pl.BlockSpec(blk, lambda b: (b,) + (0,) * nrest)

    def state_spec(shape):                                              # (2, B, H)
        blk = (shape[0], bb, shape[2])
        return pl.BlockSpec(blk, lambda b: (0, b, 0))

    def replicated(x):
        n = x.ndim
        return pl.BlockSpec(x.shape, lambda b: (0,) * n)

    data = (xt, event, clip, p_att, clip_mask)
    weights = (w_xt01, w_ev0, w_hh0, w_at1, w_hh1, b01, w_h2a_t, attp)

    in_specs = ([batched(a.shape) for a in data]
                + [state_spec(h_state.shape), state_spec(c_state.shape)]
                + [replicated(w) for w in weights])
    out_specs = (state_spec((2, B, H)), state_spec((2, B, H)),
                 batched((B, 2 * H)))
    out_shape = (jax.ShapeDtypeStruct((2, B, H), jnp.float32),
                 jax.ShapeDtypeStruct((2, B, H), jnp.float32),
                 jax.ShapeDtypeStruct((B, 2 * H), jnp.float32))

    h_new, c_new, output = pl.pallas_call(
        _make_kernel(matmul_dtype),
        grid=grid,
        in_specs=in_specs,
        out_specs=out_specs,
        out_shape=out_shape,
        compiler_params=pltpu.CompilerParams(dimension_semantics=("parallel",)),
    )(*data, h_state, c_state, *weights)

    return output, (h_new, c_new)


# --------------------------------------------------------------------------
# Parameters (PyTorch-layout init + host-side packing for the kernel)
# --------------------------------------------------------------------------
def init_torch_params(key, *, H, D_xt, D_evt, D_clip, A):
    """Deterministic synthetic parameters in native PyTorch layouts."""
    ks = iter(jax.random.split(key, 20))

    def uni(shape, bound):
        return jax.random.uniform(next(ks), shape, jnp.float32, -bound, bound)

    s = 1.0 / (H ** 0.5)
    w_ih0 = uni((4 * H, D_xt + D_evt), s)   # layer0: input = cat(xt, event)
    w_hh0 = uni((4 * H, H), s)
    b_ih0 = uni((4 * H,), s)
    b_hh0 = uni((4 * H,), s)
    w_ih1 = uni((4 * H, D_xt + D_clip), s)  # layer1: input = cat(xt, att)
    w_hh1 = uni((4 * H, H), s)
    b_ih1 = uni((4 * H,), s)
    b_hh1 = uni((4 * H,), s)

    s_ctx = 1.0 / (D_clip ** 0.5)
    s_h = 1.0 / (H ** 0.5)
    s_a = 1.0 / (A ** 0.5)
    w_ctx = uni((A, D_clip), s_ctx)
    b_ctx = uni((A,), s_ctx)
    w_h2a = uni((A, H), s_h)
    b_h2a = uni((A,), s_h)
    w_alpha = uni((1, A), s_a)
    b_alpha = uni((1,), s_a)
    return (w_ih0, w_hh0, b_ih0, b_hh0, w_ih1, w_hh1, b_ih1, b_hh1,
            w_ctx, b_ctx, w_h2a, b_h2a, w_alpha, b_alpha)


def pack_params(tp, *, D_xt, A):
    """Host-side restructuring: transpose to (in, out), split weight_ih per input
    stream (kernel never concatenates along lanes), merge xt's two projections
    into one (D_xt, 8H) matrix, and pack tiny vectors."""
    (w_ih0, w_hh0, b_ih0, b_hh0, w_ih1, w_hh1, b_ih1, b_hh1,
     w_ctx, b_ctx, w_h2a, b_h2a, w_alpha, b_alpha) = tp

    w_ih0_t = w_ih0.T                    # (D_xt + D_evt, 4H)
    w_xt0, w_ev0 = w_ih0_t[:D_xt], w_ih0_t[D_xt:]
    w_ih1_t = w_ih1.T                    # (D_xt + D_clip, 4H)
    w_xt1, w_at1 = w_ih1_t[:D_xt], w_ih1_t[D_xt:]

    w_xt01 = jnp.concatenate([w_xt0, w_xt1], axis=1)                    # (D_xt, 8H)

    b01 = jnp.stack([b_ih0 + b_hh0, b_ih1 + b_hh1], axis=0)             # (2, 4H)
    attp = jnp.stack([b_h2a,
                      w_alpha.reshape(-1),
                      jnp.broadcast_to(b_alpha, (A,))], axis=0)         # (3, A)

    return (w_xt01, w_ev0, w_hh0.T, w_at1, w_hh1.T,
            b01, w_ctx.T, b_ctx, w_h2a.T, attp)


# --------------------------------------------------------------------------
# Pure-JAX reference (matches the PyTorch forward exactly)
# --------------------------------------------------------------------------
def two_stream_core_reference(xt, event, clip, clip_mask, h_state, c_state, tp):
    (w_ih0, w_hh0, b_ih0, b_hh0, w_ih1, w_hh1, b_ih1, b_hh1,
     w_ctx, b_ctx, w_h2a, b_h2a, w_alpha, b_alpha) = tp

    def cell(x, h, c, w_ih, w_hh, b_ih, b_hh):
        gates = x @ w_ih.T + b_ih + h @ w_hh.T + b_hh
        i, f, g, o = jnp.split(gates, 4, axis=1)
        i, f, o = jax.nn.sigmoid(i), jax.nn.sigmoid(f), jax.nn.sigmoid(o)
        g = jnp.tanh(g)
        c_new = f * c + i * g
        h_new = o * jnp.tanh(c_new)
        return h_new, c_new

    pre_h1 = h_state[1]
    h0, c0 = cell(jnp.concatenate([xt, event], 1), h_state[0], c_state[0],
                  w_ih0, w_hh0, b_ih0, b_hh0)
    B, L, C = clip.shape
    att = (clip.reshape(B * L, C) @ w_ctx.T + b_ctx).reshape(B, L, -1)
    att_h = pre_h1 @ w_h2a.T + b_h2a
    dot = jnp.tanh(att + att_h[:, None, :])
    scores = (dot.reshape(B * L, -1) @ w_alpha.T + b_alpha).reshape(B, L)
    weight = jax.nn.softmax(scores, axis=1)
    weight = weight * clip_mask
    weight = weight / jnp.sum(weight, axis=1, keepdims=True)
    att_res = jnp.einsum('bl,blc->bc', weight, clip)
    h1, c1 = cell(jnp.concatenate([xt, att_res], 1), h_state[1], c_state[1],
                  w_ih1, w_hh1, b_ih1, b_hh1)
    return (jnp.concatenate([h0, h1], 1),
            jnp.stack([h0, h1], axis=0), jnp.stack([c0, c1], axis=0))


# --------------------------------------------------------------------------
if __name__ == "__main__":
    key = jax.random.PRNGKey(0)
    B = 2        # batch
    H = 32       # CG_rnn_size
    A = 32       # CG_att_hid_size
    L = 8        # att_size (number of clip features)
    D_xt = 16    # CG_input_encoding_size
    D_vid = 16   # video_context_dim (video is unused by forward)
    D_evt = 16   # event_context_dim
    D_clip = 16  # clip_context_dim (att_feat_size)

    k = jax.random.split(key, 8)
    xt = jax.random.normal(k[0], (B, D_xt), jnp.float32)
    video = jax.random.normal(k[1], (B, D_vid), jnp.float32)
    event = jax.random.normal(k[2], (B, D_evt), jnp.float32)
    clip = jax.random.normal(k[3], (B, L, D_clip), jnp.float32)
    lengths = jnp.array([L, 5])
    clip_mask = (jnp.arange(L)[None, :] < lengths[:, None]).astype(jnp.float32)
    h_state = 0.1 * jax.random.normal(k[4], (2, B, H), jnp.float32)
    c_state = 0.1 * jax.random.normal(k[5], (2, B, H), jnp.float32)

    tp = init_torch_params(k[6], H=H, D_xt=D_xt, D_evt=D_evt, D_clip=D_clip, A=A)
    params = pack_params(tp, D_xt=D_xt, A=A)

    out, (h_new, c_new) = two_stream_core(xt, video, event, clip, clip_mask,
                                          h_state, c_state, params)
    jax.block_until_ready((out, h_new, c_new))

    assert out.shape == (B, 2 * H)
    assert h_new.shape == (2, B, H) and c_new.shape == (2, B, H)

    # Correctness vs. a pure-JAX reference of the PyTorch forward (loose tolerance
    # for pl.reciprocal(approx=True) and the tanh-based sigmoid).
    out_r, h_r, c_r = two_stream_core_reference(xt, event, clip, clip_mask,
                                                h_state, c_state, tp)
    assert jnp.allclose(out, out_r, rtol=2e-2, atol=2e-2)
    assert jnp.allclose(h_new, h_r, rtol=2e-2, atol=2e-2)
    assert jnp.allclose(c_new, c_r, rtol=2e-2, atol=2e-2)

    print("KERNEL_OK")
</pallas_src>

<mosaic_0001>
module attributes {stable_mosaic.version = 11 : i64} {
  func.func @kernel(%arg0: i32, %arg1: memref<2x16xf32, #tpu.memory_space<vmem>>, %arg2: memref<2x16xf32, #tpu.memory_space<vmem>>, %arg3: memref<2x8x16xf32, #tpu.memory_space<vmem>>, %arg4: memref<2x8x32xf32, #tpu.memory_space<vmem>>, %arg5: memref<2x8xf32, #tpu.memory_space<vmem>>, %arg6: memref<2x2x32xf32, #tpu.memory_space<vmem>>, %arg7: memref<2x2x32xf32, #tpu.memory_space<vmem>>, %arg8: memref<16x256xf32, #tpu.memory_space<vmem>>, %arg9: memref<16x128xf32, #tpu.memory_space<vmem>>, %arg10: memref<32x128xf32, #tpu.memory_space<vmem>>, %arg11: memref<16x128xf32, #tpu.memory_space<vmem>>, %arg12: memref<32x128xf32, #tpu.memory_space<vmem>>, %arg13: memref<2x128xf32, #tpu.memory_space<vmem>>, %arg14: memref<32x32xf32, #tpu.memory_space<vmem>>, %arg15: memref<3x32xf32, #tpu.memory_space<vmem>>, %arg16: memref<2x2x32xf32, #tpu.memory_space<vmem>>, %arg17: memref<2x2x32xf32, #tpu.memory_space<vmem>>, %arg18: memref<2x64xf32, #tpu.memory_space<vmem>>) attributes {dimension_semantics = [#tpu.dimension_semantics<parallel>], iteration_bounds = array<i64: 1>, scalar_prefetch = 0 : i64, scratch_operands = 0 : i64, tpu.core_type = #tpu.core_type<tc>, window_params = [{transform_indices = @transform_0, window_bounds = array<i64: 2, 16>}, {transform_indices = @transform_1, window_bounds = array<i64: 2, 16>}, {transform_indices = @transform_2, window_bounds = array<i64: 2, 8, 16>}, {transform_indices = @transform_3, window_bounds = array<i64: 2, 8, 32>}, {transform_indices = @transform_4, window_bounds = array<i64: 2, 8>}, {transform_indices = @transform_5, window_bounds = array<i64: 2, 2, 32>}, {transform_indices = @transform_6, window_bounds = array<i64: 2, 2, 32>}, {pipeline_mode = #tpu.pipeline_mode<synchronous>, transform_indices = @transform_7, window_bounds = array<i64: 16, 256>}, {pipeline_mode = #tpu.pipeline_mode<synchronous>, transform_indices = @transform_8, window_bounds = array<i64: 16, 128>}, {pipeline_mode = #tpu.pipeline_mode<synchronous>, transform_indices = @transform_9, window_bounds = array<i64: 32, 128>}, {pipeline_mode = #tpu.pipeline_mode<synchronous>, transform_indices = @transform_10, window_bounds = array<i64: 16, 128>}, {pipeline_mode = #tpu.pipeline_mode<synchronous>, transform_indices = @transform_11, window_bounds = array<i64: 32, 128>}, {pipeline_mode = #tpu.pipeline_mode<synchronous>, transform_indices = @transform_12, window_bounds = array<i64: 2, 128>}, {pipeline_mode = #tpu.pipeline_mode<synchronous>, transform_indices = @transform_13, window_bounds = array<i64: 32, 32>}, {pipeline_mode = #tpu.pipeline_mode<synchronous>, transform_indices = @transform_14, window_bounds = array<i64: 3, 32>}, {transform_indices = @transform_15, window_bounds = array<i64: 2, 2, 32>}, {transform_indices = @transform_16, window_bounds = array<i64: 2, 2, 32>}, {transform_indices = @transform_17, window_bounds = array<i64: 2, 64>}]} {
    %c0 = arith.constant 0 : index
    %c0_0 = arith.constant 0 : index
    %0 = vector.load %arg1[%c0, %c0_0] : memref<2x16xf32, #tpu.memory_space<vmem>>, vector<2x16xf32>
    %c0_1 = arith.constant 0 : index
    %c0_2 = arith.constant 0 : index
    %c0_3 = arith.constant 0 : index
    %1 = vector.load %arg6[%c0_1, %c0_2, %c0_3] : memref<2x2x32xf32, #tpu.memory_space<vmem>>, vector<1x2x32xf32>
    %2 = vector.shape_cast %1 : vector<1x2x32xf32> to vector<2x32xf32>
    %c1 = arith.constant 1 : index
    %c0_4 = arith.constant 0 : index
    %c0_5 = arith.constant 0 : index
    %3 = vector.load %arg6[%c1, %c0_4, %c0_5] : memref<2x2x32xf32, #tpu.memory_space<vmem>>, vector<1x2x32xf32>
    %4 = vector.shape_cast %3 : vector<1x2x32xf32> to vector<2x32xf32>
    %5 = tpu.iota {dimensions = array<i32: 1>} : vector<2x128xi32>
    %c64_i32 = arith.constant 64 : i32
    %6 = vector.broadcast %c64_i32 : i32 to vector<2x128xi32>
    %7 = arith.cmpi sge, %5, %6 : vector<2x128xi32>
    %c96_i32 = arith.constant 96 : i32
    %8 = vector.broadcast %c96_i32 : i32 to vector<2x128xi32>
    %9 = arith.cmpi slt, %5, %8 : vector<2x128xi32>
    %10 = arith.andi %7, %9 : vector<2x128xi1>
    %cst = arith.constant 1.000000e+00 : f32
    %cst_6 = arith.constant 5.000000e-01 : f32
    %11 = vector.broadcast %cst : f32 to vector<2x128xf32>
    %12 = vector.broadcast %cst_6 : f32 to vector<2x128xf32>
    %13 = arith.select %10, %11, %12 : vector<2x128xi1>, vector<2x128xf32>
    %cst_7 = arith.constant 0.000000e+00 : f32
    %cst_8 = arith.constant 5.000000e-01 : f32
    %14 = vector.broadcast %cst_7 : f32 to vector<2x128xf32>
    %15 = vector.broadcast %cst_8 : f32 to vector<2x128xf32>
    %16 = arith.select %10, %14, %15 : vector<2x128xi1>, vector<2x128xf32>
    %c0_9 = arith.constant 0 : index
    %c0_10 = arith.constant 0 : index
    %17 = vector.load %arg8[%c0_9, %c0_10] : memref<16x256xf32, #tpu.memory_space<vmem>>, vector<16x256xf32>
    %cst_11 = arith.constant dense<0.000000e+00> : vector<2x256xf32>
    %18 = tpu.matmul %0, %17, %cst_11 {dimension_numbers = #tpu.dot_dimension_numbers<[1], [0], [0], [1], [0, 0, 1, 1], [], []>} : vector<2x16xf32>, vector<16x256xf32>, vector<2x256xf32> -> vector<2x256xf32>
    %19 = vector.extract_strided_slice %18 {offsets = [0, 0], sizes = [2, 128], strides = [1, 1]} : vector<2x256xf32> to vector<2x128xf32>
    %c0_12 = arith.constant 0 : index
    %c0_13 = arith.constant 0 : index
    %20 = vector.load %arg2[%c0_12, %c0_13] : memref<2x16xf32, #tpu.memory_space<vmem>>, vector<2x16xf32>
    %c0_14 = arith.constant 0 : index
    %c0_15 = arith.constant 0 : index
    %21 = vector.load %arg9[%c0_14, %c0_15] : memref<16x128xf32, #tpu.memory_space<vmem>>, vector<16x128xf32>
    %cst_16 = arith.constant dense<0.000000e+00> : vector<2x128xf32>
    %22 = tpu.matmul %20, %21, %cst_16 {dimension_numbers = #tpu.dot_dimension_numbers<[1], [0], [0], [1], [0, 0, 1, 1], [], []>} : vector<2x16xf32>, vector<16x128xf32>, vector<2x128xf32> -> vector<2x128xf32>
    %23 = arith.addf %19, %22 : vector<2x128xf32>
    %c0_17 = arith.constant 0 : index
    %c0_18 = arith.constant 0 : index
    %24 = vector.load %arg10[%c0_17, %c0_18] : memref<32x128xf32, #tpu.memory_space<vmem>>, vector<32x128xf32>
    %cst_19 = arith.constant dense<0.000000e+00> : vector<2x128xf32>
    %25 = tpu.matmul %2, %24, %cst_19 {dimension_numbers = #tpu.dot_dimension_numbers<[1], [0], [0], [1], [0, 0, 1, 1], [], []>} : vector<2x32xf32>, vector<32x128xf32>, vector<2x128xf32> -> vector<2x128xf32>
    %26 = arith.addf %23, %25 : vector<2x128xf32>
    %c0_20 = arith.constant 0 : index
    %c0_21 = arith.constant 0 : index
    %27 = vector.load %arg13[%c0_20, %c0_21] : memref<2x128xf32, #tpu.memory_space<vmem>>, vector<1x128xf32>
    %28 = vector.broadcast %27 : vector<1x128xf32> to vector<2x128xf32>
    %29 = arith.addf %26, %28 : vector<2x128xf32>
    %c0_22 = arith.constant 0 : index
    %c0_23 = arith.constant 0 : index
    %c0_24 = arith.constant 0 : index
    %30 = vector.load %arg7[%c0_22, %c0_23, %c0_24] : memref<2x2x32xf32, #tpu.memory_space<vmem>>, vector<1x2x32xf32>
    %31 = vector.shape_cast %30 : vector<1x2x32xf32> to vector<2x32xf32>
    %32 = arith.mulf %29, %13 : vector<2x128xf32>
    %33 = math.tanh %32 : vector<2x128xf32>
    %34 = arith.mulf %13, %33 : vector<2x128xf32>
    %35 = arith.addf %16, %34 : vector<2x128xf32>
    %36 = vector.extract_strided_slice %35 {offsets = [0, 0], sizes = [2, 32], strides = [1, 1]} : vector<2x128xf32> to vector<2x32xf32>
    %37 = vector.extract_strided_slice %35 {offsets = [0, 32], sizes = [2, 32], strides = [1, 1]} : vector<2x128xf32> to vector<2x32xf32>
    %38 = vector.extract_strided_slice %35 {offsets = [0, 64], sizes = [2, 32], strides = [1, 1]} : vector<2x128xf32> to vector<2x32xf32>
    %39 = vector.extract_strided_slice %35 {offsets = [0, 96], sizes = [2, 32], strides = [1, 1]} : vector<2x128xf32> to vector<2x32xf32>
    %40 = arith.mulf %37, %31 : vector<2x32xf32>
    %41 = arith.mulf %36, %38 : vector<2x32xf32>
    %42 = arith.addf %40, %41 : vector<2x32xf32>
    %43 = math.tanh %42 : vector<2x32xf32>
    %44 = arith.mulf %39, %43 : vector<2x32xf32>
    %c0_25 = arith.constant 0 : index
    %c0_26 = arith.constant 0 : index
    %45 = vector.load %arg14[%c0_25, %c0_26] : memref<32x32xf32, #tpu.memory_space<vmem>>, vector<32x32xf32>
    %cst_27 = arith.constant dense<0.000000e+00> : vector<2x32xf32>
    %46 = tpu.matmul %4, %45, %cst_27 {dimension_numbers = #tpu.dot_dimension_numbers<[1], [0], [0], [1], [0, 0, 1, 1], [], []>} : vector<2x32xf32>, vector<32x32xf32>, vector<2x32xf32> -> vector<2x32xf32>
    %c0_28 = arith.constant 0 : index
    %c0_29 = arith.constant 0 : index
    %47 = vector.load %arg15[%c0_28, %c0_29] : memref<3x32xf32, #tpu.memory_space<vmem>>, vector<1x32xf32>
    %48 = vector.broadcast %47 : vector<1x32xf32> to vector<2x32xf32>
    %49 = arith.addf %46, %48 : vector<2x32xf32>
    %c0_30 = arith.constant 0 : index
    %c0_31 = arith.constant 0 : index
    %c0_32 = arith.constant 0 : index
    %50 = vector.load %arg4[%c0_30, %c0_31, %c0_32] : memref<2x8x32xf32, #tpu.memory_space<vmem>>, vector<2x8x32xf32>
    %51 = vector.shape_cast %49 : vector<2x32xf32> to vector<2x1x32xf32>
    %52 = vector.broadcast %51 : vector<2x1x32xf32> to vector<2x8x32xf32>
    %53 = arith.addf %50, %52 : vector<2x8x32xf32>
    %54 = math.tanh %53 : vector<2x8x32xf32>
    %c1_33 = arith.constant 1 : index
    %c0_34 = arith.constant 0 : index
    %55 = vector.load %arg15[%c1_33, %c0_34] : memref<3x32xf32, #tpu.memory_space<vmem>>, vector<1x32xf32>
    %56 = vector.shape_cast %55 : vector<1x32xf32> to vector<1x1x32xf32>
    %57 = vector.broadcast %56 : vector<1x1x32xf32> to vector<2x8x32xf32>
    %58 = arith.mulf %54, %57 : vector<2x8x32xf32>
    %cst_35 = arith.constant dense<0.000000e+00> : vector<2x8xf32>
    %59 = vector.multi_reduction <add>, %58, %cst_35 [2] : vector<2x8x32xf32> to vector<2x8xf32>
    %c2 = arith.constant 2 : index
    %c0_36 = arith.constant 0 : index
    %60 = vector.load %arg15[%c2, %c0_36] : memref<3x32xf32, #tpu.memory_space<vmem>>, vector<1x1xf32>
    %61 = vector.broadcast %60 : vector<1x1xf32> to vector<2x8xf32>
    %62 = arith.addf %59, %61 : vector<2x8xf32>
    %cst_37 = arith.constant dense<0xFF800000> : vector<2xf32>
    %63 = vector.multi_reduction <maximumf>, %62, %cst_37 [1] : vector<2x8xf32> to vector<2xf32>
    %64 = vector.shape_cast %63 : vector<2xf32> to vector<2x1xf32>
    %65 = vector.broadcast %64 : vector<2x1xf32> to vector<2x8xf32>
    %66 = arith.subf %62, %65 : vector<2x8xf32>
    %67 = math.exp %66 : vector<2x8xf32>
    %c0_38 = arith.constant 0 : index
    %c0_39 = arith.constant 0 : index
    %68 = vector.load %arg5[%c0_38, %c0_39] : memref<2x8xf32, #tpu.memory_space<vmem>>, vector<2x8xf32>
    %69 = arith.mulf %67, %68 : vector<2x8xf32>
    %cst_40 = arith.constant dense<0.000000e+00> : vector<2xf32>
    %70 = vector.multi_reduction <add>, %69, %cst_40 [1] : vector<2x8xf32> to vector<2xf32>
    %71 = vector.shape_cast %70 : vector<2xf32> to vector<2x1xf32>
    %72 = tpu.reciprocal %71 {approx = true} : vector<2x1xf32> -> vector<2x1xf32>
    %73 = vector.broadcast %72 : vector<2x1xf32> to vector<2x8xf32>
    %74 = arith.mulf %69, %73 : vector<2x8xf32>
    %75 = vector.shape_cast %74 : vector<2x8xf32> to vector<2x8x1xf32>
    %c0_41 = arith.constant 0 : index
    %c0_42 = arith.constant 0 : index
    %c0_43 = arith.constant 0 : index
    %76 = vector.load %arg3[%c0_41, %c0_42, %c0_43] : memref<2x8x16xf32, #tpu.memory_space<vmem>>, vector<2x8x16xf32>
    %77 = vector.broadcast %75 : vector<2x8x1xf32> to vector<2x8x16xf32>
    %78 = arith.mulf %77, %76 : vector<2x8x16xf32>
    %cst_44 = arith.constant dense<0.000000e+00> : vector<2x16xf32>
    %79 = vector.multi_reduction <add>, %78, %cst_44 [1] : vector<2x8x16xf32> to vector<2x16xf32>
    %80 = vector.extract_strided_slice %18 {offsets = [0, 128], sizes = [2, 128], strides = [1, 1]} : vector<2x256xf32> to vector<2x128xf32>
    %c0_45 = arith.constant 0 : index
    %c0_46 = arith.constant 0 : index
    %81 = vector.load %arg11[%c0_45, %c0_46] : memref<16x128xf32, #tpu.memory_space<vmem>>, vector<16x128xf32>
    %cst_47 = arith.constant dense<0.000000e+00> : vector<2x128xf32>
    %82 = tpu.matmul %79, %81, %cst_47 {dimension_numbers = #tpu.dot_dimension_numbers<[1], [0], [0], [1], [0, 0, 1, 1], [], []>} : vector<2x16xf32>, vector<16x128xf32>, vector<2x128xf32> -> vector<2x128xf32>
    %83 = arith.addf %80, %82 : vector<2x128xf32>
    %c0_48 = arith.constant 0 : index
    %c0_49 = arith.constant 0 : index
    %84 = vector.load %arg12[%c0_48, %c0_49] : memref<32x128xf32, #tpu.memory_space<vmem>>, vector<32x128xf32>
    %cst_50 = arith.constant dense<0.000000e+00> : vector<2x128xf32>
    %85 = tpu.matmul %4, %84, %cst_50 {dimension_numbers = #tpu.dot_dimension_numbers<[1], [0], [0], [1], [0, 0, 1, 1], [], []>} : vector<2x32xf32>, vector<32x128xf32>, vector<2x128xf32> -> vector<2x128xf32>
    %86 = arith.addf %83, %85 : vector<2x128xf32>
    %c1_51 = arith.constant 1 : index
    %c0_52 = arith.constant 0 : index
    %87 = vector.load %arg13[%c1_51, %c0_52] : memref<2x128xf32, #tpu.memory_space<vmem>>, vector<1x128xf32>
    %88 = vector.broadcast %87 : vector<1x128xf32> to vector<2x128xf32>
    %89 = arith.addf %86, %88 : vector<2x128xf32>
    %c1_53 = arith.constant 1 : index
    %c0_54 = arith.constant 0 : index
    %c0_55 = arith.constant 0 : index
    %90 = vector.load %arg7[%c1_53, %c0_54, %c0_55] : memref<2x2x32xf32, #tpu.memory_space<vmem>>, vector<1x2x32xf32>
    %91 = vector.shape_cast %90 : vector<1x2x32xf32> to vector<2x32xf32>
    %92 = arith.mulf %89, %13 : vector<2x128xf32>
    %93 = math.tanh %92 : vector<2x128xf32>
    %94 = arith.mulf %13, %93 : vector<2x128xf32>
    %95 = arith.addf %16, %94 : vector<2x128xf32>
    %96 = vector.extract_strided_slice %95 {offsets = [0, 0], sizes = [2, 32], strides = [1, 1]} : vector<2x128xf32> to vector<2x32xf32>
    %97 = vector.extract_strided_slice %95 {offsets = [0, 32], sizes = [2, 32], strides = [1, 1]} : vector<2x128xf32> to vector<2x32xf32>
    %98 = vector.extract_strided_slice %95 {offsets = [0, 64], sizes = [2, 32], strides = [1, 1]} : vector<2x128xf32> to vector<2x32xf32>
    %99 = vector.extract_strided_slice %95 {offsets = [0, 96], sizes = [2, 32], strides = [1, 1]} : vector<2x128xf32> to vector<2x32xf32>
    %100 = arith.mulf %97, %91 : vector<2x32xf32>
    %101 = arith.mulf %96, %98 : vector<2x32xf32>
    %102 = arith.addf %100, %101 : vector<2x32xf32>
    %103 = math.tanh %102 : vector<2x32xf32>
    %104 = arith.mulf %99, %103 : vector<2x32xf32>
    %c0_56 = arith.constant 0 : index
    %c0_57 = arith.constant 0 : index
    %c0_58 = arith.constant 0 : index
    %105 = vector.load %arg16[%c0_56, %c0_57, %c0_58] : memref<2x2x32xf32, #tpu.memory_space<vmem>>, vector<1x2x32xf32>
    %106 = vector.shape_cast %105 : vector<1x2x32xf32> to vector<2x32xf32>
    %107 = vector.shape_cast %44 : vector<2x32xf32> to vector<1x2x32xf32>
    tpu.vector_store %arg16[%c0_56, %c0_57, %c0_58], %107 {strides = array<i32>} : memref<2x2x32xf32, #tpu.memory_space<vmem>>, vector<1x2x32xf32>,
    %c1_59 = arith.constant 1 : index
    %c0_60 = arith.constant 0 : index
    %c0_61 = arith.constant 0 : index
    %108 = vector.load %arg16[%c1_59, %c0_60, %c0_61] : memref<2x2x32xf32, #tpu.memory_space<vmem>>, vector<1x2x32xf32>
    %109 = vector.shape_cast %108 : vector<1x2x32xf32> to vector<2x32xf32>
    %110 = vector.shape_cast %104 : vector<2x32xf32> to vector<1x2x32xf32>
    tpu.vector_store %arg16[%c1_59, %c0_60, %c0_61], %110 {strides = array<i32>} : memref<2x2x32xf32, #tpu.memory_space<vmem>>, vector<1x2x32xf32>,
    %c0_62 = arith.constant 0 : index
    %c0_63 = arith.constant 0 : index
    %c0_64 = arith.constant 0 : index
    %111 = vector.load %arg17[%c0_62, %c0_63, %c0_64] : memref<2x2x32xf32, #tpu.memory_space<vmem>>, vector<1x2x32xf32>
    %112 = vector.shape_cast %111 : vector<1x2x32xf32> to vector<2x32xf32>
    %113 = vector.shape_cast %42 : vector<2x32xf32> to vector<1x2x32xf32>
    tpu.vector_store %arg17[%c0_62, %c0_63, %c0_64], %113 {strides = array<i32>} : memref<2x2x32xf32, #tpu.memory_space<vmem>>, vector<1x2x32xf32>,
    %c1_65 = arith.constant 1 : index
    %c0_66 = arith.constant 0 : index
    %c0_67 = arith.constant 0 : index
    %114 = vector.load %arg17[%c1_65, %c0_66, %c0_67] : memref<2x2x32xf32, #tpu.memory_space<vmem>>, vector<1x2x32xf32>
    %115 = vector.shape_cast %114 : vector<1x2x32xf32> to vector<2x32xf32>
    %116 = vector.shape_cast %102 : vector<2x32xf32> to vector<1x2x32xf32>
    tpu.vector_store %arg17[%c1_65, %c0_66, %c0_67], %116 {strides = array<i32>} : memref<2x2x32xf32, #tpu.memory_space<vmem>>, vector<1x2x32xf32>,
    %c0_68 = arith.constant 0 : index
    %c0_69 = arith.constant 0 : index
    %117 = vector.load %arg18[%c0_68, %c0_69] : memref<2x64xf32, #tpu.memory_space<vmem>>, vector<2x32xf32>
    tpu.vector_store %arg18[%c0_68, %c0_69], %44 {strides = array<i32>} : memref<2x64xf32, #tpu.memory_space<vmem>>, vector<2x32xf32>,
    %c0_70 = arith.constant 0 : index
    %c32 = arith.constant 32 : index
    %118 = vector.load %arg18[%c0_70, %c32] : memref<2x64xf32, #tpu.memory_space<vmem>>, vector<2x32xf32>
    tpu.vector_store %arg18[%c0_70, %c32], %104 {strides = array<i32>} : memref<2x64xf32, #tpu.memory_space<vmem>>, vector<2x32xf32>,
    return
  }
  func.func @transform_0(%arg0: i32) -> (i32, i32) {
    %c0_i32 = arith.constant 0 : i32
    %c0_i32_0 = arith.constant 0 : i32
    return %arg0, %c0_i32 : i32, i32
  }
  func.func @transform_1(%arg0: i32) -> (i32, i32) {
    %c0_i32 = arith.constant 0 : i32
    %c0_i32_0 = arith.constant 0 : i32
    return %arg0, %c0_i32 : i32, i32
  }
  func.func @transform_2(%arg0: i32) -> (i32, i32, i32) {
    %c0_i32 = arith.constant 0 : i32
    %c0_i32_0 = arith.constant 0 : i32
    %c0_i32_1 = arith.constant 0 : i32
    return %arg0, %c0_i32, %c0_i32_0 : i32, i32, i32
  }
  func.func @transform_3(%arg0: i32) -> (i32, i32, i32) {
    %c0_i32 = arith.constant 0 : i32
    %c0_i32_0 = arith.constant 0 : i32
    %c0_i32_1 = arith.constant 0 : i32
    return %arg0, %c0_i32, %c0_i32_0 : i32, i32, i32
  }
  func.func @transform_4(%arg0: i32) -> (i32, i32) {
    %c0_i32 = arith.constant 0 : i32
    %c0_i32_0 = arith.constant 0 : i32
    return %arg0, %c0_i32 : i32, i32
  }
  func.func @transform_5(%arg0: i32) -> (i32, i32, i32) {
    %c0_i32 = arith.constant 0 : i32
    %c0_i32_0 = arith.constant 0 : i32
    %c0_i32_1 = arith.constant 0 : i32
    return %c0_i32, %arg0, %c0_i32_0 : i32, i32, i32
  }
  func.func @transform_6(%arg0: i32) -> (i32, i32, i32) {
    %c0_i32 = arith.constant 0 : i32
    %c0_i32_0 = arith.constant 0 : i32
    %c0_i32_1 = arith.constant 0 : i32
    return %c0_i32, %arg0, %c0_i32_0 : i32, i32, i32
  }
  func.func @transform_7(%arg0: i32) -> (i32, i32) {
    %c0_i32 = arith.constant 0 : i32
    %c0_i32_0 = arith.constant 0 : i32
    %c0_i32_1 = arith.constant 0 : i32
    return %c0_i32, %c0_i32_0 : i32, i32
  }
  func.func @transform_8(%arg0: i32) -> (i32, i32) {
    %c0_i32 = arith.constant 0 : i32
    %c0_i32_0 = arith.constant 0 : i32
    %c0_i32_1 = arith.constant 0 : i32
    return %c0_i32, %c0_i32_0 : i32, i32
  }
  func.func @transform_9(%arg0: i32) -> (i32, i32) {
    %c0_i32 = arith.constant 0 : i32
    %c0_i32_0 = arith.constant 0 : i32
    %c0_i32_1 = arith.constant 0 : i32
    return %c0_i32, %c0_i32_0 : i32, i32
  }
  func.func @transform_10(%arg0: i32) -> (i32, i32) {
    %c0_i32 = arith.constant 0 : i32
    %c0_i32_0 = arith.constant 0 : i32
    %c0_i32_1 = arith.constant 0 : i32
    return %c0_i32, %c0_i32_0 : i32, i32
  }
  func.func @transform_11(%arg0: i32) -> (i32, i32) {
    %c0_i32 = arith.constant 0 : i32
    %c0_i32_0 = arith.constant 0 : i32
    %c0_i32_1 = arith.constant 0 : i32
    return %c0_i32, %c0_i32_0 : i32, i32
  }
  func.func @transform_12(%arg0: i32) -> (i32, i32) {
    %c0_i32 = arith.constant 0 : i32
    %c0_i32_0 = arith.constant 0 : i32
    %c0_i32_1 = arith.constant 0 : i32
    return %c0_i32, %c0_i32_0 : i32, i32
  }
  func.func @transform_13(%arg0: i32) -> (i32, i32) {
    %c0_i32 = arith.constant 0 : i32
    %c0_i32_0 = arith.constant 0 : i32
    %c0_i32_1 = arith.constant 0 : i32
    return %c0_i32, %c0_i32_0 : i32, i32
  }
  func.func @transform_14(%arg0: i32) -> (i32, i32) {
    %c0_i32 = arith.constant 0 : i32
    %c0_i32_0 = arith.constant 0 : i32
    %c0_i32_1 = arith.constant 0 : i32
    return %c0_i32, %c0_i32_0 : i32, i32
  }
  func.func @transform_15(%arg0: i32) -> (i32, i32, i32) {
    %c0_i32 = arith.constant 0 : i32
    %c0_i32_0 = arith.constant 0 : i32
    %c0_i32_1 = arith.constant 0 : i32
    return %c0_i32, %arg0, %c0_i32_0 : i32, i32, i32
  }
  func.func @transform_16(%arg0: i32) -> (i32, i32, i32) {
    %c0_i32 = arith.constant 0 : i32
    %c0_i32_0 = arith.constant 0 : i32
    %c0_i32_1 = arith.constant 0 : i32
    return %c0_i32, %arg0, %c0_i32_0 : i32, i32, i32
  }
  func.func @transform_17(%arg0: i32) -> (i32, i32) {
    %c0_i32 = arith.constant 0 : i32
    %c0_i32_0 = arith.constant 0 : i32
    return %arg0, %c0_i32 : i32, i32
  }
}

</mosaic_0001>

<llo_original>
// kernel: tpu_custom_call.1
$region0: #{tpu_custom_call.1}
  #allocation0 [shape = 'u32[]', space=smem, size = 0x4, offset = 0x4, fixed_abs, tag = 'smem constant byte address 0x4 - core index']
  #allocation1 [shape = 'u32[144,128]{1,0:T(1,128)}', space=vmem, size = 0x12000, scoped, tag = 'internal scratch']
  %s0 = inlined_call_operand.hbm [shape: f32[2,16], index: 0, kind: input, shape index: {}]
  %s1 = inlined_call_operand.hbm [shape: f32[2,16], index: 1, kind: input, shape index: {}]
  %s2 = inlined_call_operand.hbm [shape: f32[2,8,16], index: 2, kind: input, shape index: {}]
  %s3 = inlined_call_operand.hbm [shape: f32[2,8,32], index: 3, kind: input, shape index: {}]
  %s4 = inlined_call_operand.hbm [shape: f32[2,8], index: 4, kind: input, shape index: {}]
  %s5 = inlined_call_operand.hbm [shape: f32[2,2,32], index: 5, kind: input, shape index: {}]
  %s6 = inlined_call_operand.hbm [shape: f32[2,2,32], index: 6, kind: input, shape index: {}]
  %s7 = inlined_call_operand.hbm [shape: f32[16,256], index: 7, kind: input, shape index: {}]
  %s8 = inlined_call_operand.hbm [shape: f32[16,128], index: 8, kind: input, shape index: {}]
  %s9 = inlined_call_operand.vmem [shape: f32[32,128], index: 9, kind: input, shape index: {}]
  %s10 = inlined_call_operand.hbm [shape: f32[16,128], index: 10, kind: input, shape index: {}]
  %s11 = inlined_call_operand.hbm [shape: f32[32,128], index: 11, kind: input, shape index: {}]
  %s12 = inlined_call_operand.vmem [shape: f32[2,128], index: 12, kind: input, shape index: {}]
  %s13 = inlined_call_operand.hbm [shape: f32[32,32], index: 13, kind: input, shape index: {}]
  %s14 = inlined_call_operand.vmem [shape: f32[3,32], index: 14, kind: input, shape index: {}]
  %s15 = inlined_call_operand.hbm [shape: f32[2,2,32], index: 15, kind: output, shape index: {0}]
  %s16 = inlined_call_operand.hbm [shape: f32[2,2,32], index: 16, kind: output, shape index: {1}]
  %s17 = inlined_call_operand.hbm [shape: f32[2,64], index: 17, kind: output, shape index: {2}]
  %18 = xla_tuple %s15, %s16, %s17
  %s19 = sld [smem:[#allocation0]]
  $region134: #{tpu_custom_call.1} parent=0
    _
  %s21 = ssub.s32 1, %s19
  %s22 = scalar_select 0, %s21, %s19
  $region1: #{tpu_custom_call.1} parent=0
    #allocation2 [shape = 'u8[1024]{0}', space=vmem, size = 0x400, scoped, tag = 'input window, operand 0, single buffered']
    #allocation3 [shape = 's32[1]{0}', space=sflag, size = 0x4, scoped, tag = 'scoped memory for tpu_custom_call.1']
    #allocation4 [shape = 's32[1]{0}', space=sflag, size = 0x4, scoped, tag = 'scoped memory for tpu_custom_call.1']
    #allocation5 [shape = 'u8[1024]{0}', space=vmem, size = 0x400, scoped, tag = 'input window, operand 1, single buffered']
    #allocation6 [shape = 's32[1]{0}', space=sflag, size = 0x4, scoped, tag = 'scoped memory for tpu_custom_call.1']
    #allocation7 [shape = 'u8[8192]{0}', space=vmem, size = 0x2000, scoped, tag = 'input window, operand 2, single buffered']
    #allocation8 [shape = 'u8[8192]{0}', space=vmem, size = 0x2000, scoped, tag = 'input window, operand 3, single buffered']
    #allocation9 [shape = 's32[1]{0}', space=sflag, size = 0x4, scoped, tag = 'scoped memory for tpu_custom_call.1']
    #allocation10 [shape = 'u8[1024]{0}', space=vmem, size = 0x400, scoped, tag = 'input window, operand 4, single buffered']
    #allocation11 [shape = 'u8[2048]{0}', space=vmem, size = 0x800, scoped, tag = 'input window, operand 5, single buffered']
    #allocation12 [shape = 's32[1]{0}', space=sflag, size = 0x4, scoped, tag = 'scoped memory for tpu_custom_call.1']
    #allocation13 [shape = 'u8[2048]{0}', space=vmem, size = 0x800, scoped, tag = 'input window, operand 6, single buffered']
    #allocation14 [shape = 'u8[16384]{0}', space=vmem, size = 0x4000, scoped, tag = 'input window, operand 7, single buffered']
    #allocation15 [shape = 's32[1]{0}', space=sflag, size = 0x4, scoped, tag = 'scoped memory for tpu_custom_call.1']
    #allocation16 [shape = 'u8[8192]{0}', space=vmem, size = 0x2000, scoped, tag = 'input window, operand 8, single buffered']
    #allocation17 [shape = 'u8[8192]{0}', space=vmem, size = 0x2000, scoped, tag = 'input window, operand 10, single buffered']
    #allocation18 [shape = 's32[1]{0}', space=sflag, size = 0x4, scoped, tag = 'scoped memory for tpu_custom_call.1']
    #allocation19 [shape = 'u8[16384]{0}', space=vmem, size = 0x4000, scoped, tag = 'input window, operand 11, single buffered']
    #allocation20 [shape = 'u8[16384]{0}', space=vmem, size = 0x4000, scoped, tag = 'input window, operand 13, single buffered']
    #allocation21 [shape = 's32[1]{0}', space=sflag, size = 0x4, scoped, tag = 'scoped memory for tpu_custom_call.1']
    #allocation22 [shape = 'u8[2048]{0}', space=vmem, size = 0x800, scoped, tag = 'output window, operand 0, single buffered']
    #allocation23 [shape = 'u8[2048]{0}', space=vmem, size = 0x800, scoped, tag = 'output window, operand 1, single buffered']
    #allocation24 [shape = 's32[1]{0}', space=sflag, size = 0x4, scoped, tag = 'scoped memory for tpu_custom_call.1']
    #allocation25 [shape = 'u8[1024]{0}', space=vmem, size = 0x400, scoped, tag = 'output window, operand 2, single buffered']
    %23 = vsyncpa [#allocation3], 0
    %24 = vsyncpa [#allocation6], 0
    %25 = vsyncpa [#allocation9], 0
    %26 = vsyncpa [#allocation12], 0
    %27 = vsyncpa [#allocation15], 0
    %28 = vsyncpa [#allocation18], 0
    %29 = vsyncpa [#allocation21], 0
    %30 = vsyncpa [#allocation4], 0
    %31 = vsyncpa [#allocation24], 0
    // Predicated region
    $region2: #{tpu_custom_call.1} parent=1 // pred_check
      _
    $region3: #{tpu_custom_call.1} parent=1 // pred_check_branch
      %33 = sbr.rel (0) target = $region5
    $region4: #{tpu_custom_call.1} parent=1 // pred_region
      %s35 = ssub.s32 32, 32
      %36 = vsyncadd [#allocation3], %s35
      %s38 = sshll.u32 [#allocation2], 4
      %s39 = int_to_ptr.vmem [resolvable:$true] %s38
      %41 = dma.hbm_to_vmem [thread:$0]  %s0, 32, %s39, [#allocation3]
    $region5: #{tpu_custom_call.1} parent=1 // pred_fallthru
      _
    // Predicated region
    $region6: #{tpu_custom_call.1} parent=1 // pred_check
      _
    $region7: #{tpu_custom_call.1} parent=1 // pred_check_branch
      %43 = sbr.rel (0) target = $region9
    $region8: #{tpu_custom_call.1} parent=1 // pred_region
      %s45 = ssub.s32 32, 32
      %46 = vsyncadd [#allocation6], %s45
      %s48 = sshll.u32 [#allocation5], 4
      %s49 = int_to_ptr.vmem [resolvable:$true] %s48
      %51 = dma.hbm_to_vmem [thread:$0]  %s1, 32, %s49, [#allocation6]
    $region9: #{tpu_custom_call.1} parent=1 // pred_fallthru
      _
    // Predicated region
    $region10: #{tpu_custom_call.1} parent=1 // pred_check
      _
    $region11: #{tpu_custom_call.1} parent=1 // pred_check_branch
      %53 = sbr.rel (0) target = $region13
    $region12: #{tpu_custom_call.1} parent=1 // pred_region
      %s55 = ssub.s32 256, 256
      %56 = vsyncadd [#allocation6], %s55
      %s57 = sshll.u32 [#allocation7], 4
      %s58 = int_to_ptr.vmem [resolvable:$true] %s57
      %63 = dma.hbm_to_vmem [thread:$0]  %s2, 256, %s58, [#allocation6], 128, 128, 8
    $region13: #{tpu_custom_call.1} parent=1 // pred_fallthru
      _
    // Predicated region
    $region14: #{tpu_custom_call.1} parent=1 // pred_check
      _
    $region15: #{tpu_custom_call.1} parent=1 // pred_check_branch
      %65 = sbr.rel (0) target = $region17
    $region16: #{tpu_custom_call.1} parent=1 // pred_region
      %s67 = ssub.s32 256, 256
      %68 = vsyncadd [#allocation9], %s67
      %s69 = sshll.u32 [#allocation8], 4
      %s70 = int_to_ptr.vmem [resolvable:$true] %s69
      %75 = dma.hbm_to_vmem [thread:$0]  %s3, 256, %s70, [#allocation9], 128, 128, 8
    $region17: #{tpu_custom_call.1} parent=1 // pred_fallthru
      _
    // Predicated region
    $region18: #{tpu_custom_call.1} parent=1 // pred_check
      _
    $region19: #{tpu_custom_call.1} parent=1 // pred_check_branch
      %77 = sbr.rel (0) target = $region21
    $region20: #{tpu_custom_call.1} parent=1 // pred_region
      %s79 = ssub.s32 32, 32
      %80 = vsyncadd [#allocation9], %s79
      %s82 = sshll.u32 [#allocation10], 4
      %s83 = int_to_ptr.vmem [resolvable:$true] %s82
      %85 = dma.hbm_to_vmem [thread:$0]  %s4, 32, %s83, [#allocation9]
    $region21: #{tpu_custom_call.1} parent=1 // pred_fallthru
      _
    // Predicated region
    $region22: #{tpu_custom_call.1} parent=1 // pred_check
      _
    $region23: #{tpu_custom_call.1} parent=1 // pred_check_branch
      %87 = sbr.rel (0) target = $region25
    $region24: #{tpu_custom_call.1} parent=1 // pred_region
      %s89 = ssub.s32 64, 64
      %90 = vsyncadd [#allocation12], %s89
      %s91 = sshll.u32 [#allocation11], 4
      %s92 = int_to_ptr.vmem [resolvable:$true] %s91
      %97 = dma.hbm_to_vmem [thread:$0]  %s5, 64, %s92, [#allocation12], 32, 32, 2
    $region25: #{tpu_custom_call.1} parent=1 // pred_fallthru
      _
    // Predicated region
    $region26: #{tpu_custom_call.1} parent=1 // pred_check
      _
    $region27: #{tpu_custom_call.1} parent=1 // pred_check_branch
      %99 = sbr.rel (0) target = $region29
    $region28: #{tpu_custom_call.1} parent=1 // pred_region
      %s101 = ssub.s32 64, 64
      %102 = vsyncadd [#allocation12], %s101
      %s103 = sshll.u32 [#allocation13], 4
      %s104 = int_to_ptr.vmem [resolvable:$true] %s103
      %109 = dma.hbm_to_vmem [thread:$0]  %s6, 64, %s104, [#allocation12], 32, 32, 2
    $region29: #{tpu_custom_call.1} parent=1 // pred_fallthru
      _
    // Predicated region
    $region30: #{tpu_custom_call.1} parent=1 // pred_check
      _
    $region31: #{tpu_custom_call.1} parent=1 // pred_check_branch
      %111 = sbr.rel (0) target = $region33
    $region32: #{tpu_custom_call.1} parent=1 // pred_region
      %s113 = ssub.s32 512, 512
      %114 = vsyncadd [#allocation15], %s113
      %s115 = sshll.u32 [#allocation14], 4
      %s116 = int_to_ptr.vmem [resolvable:$true] %s115
      %121 = dma.hbm_to_vmem [thread:$0]  %s7, 512, %s116, [#allocation15], 256, 256, 16
    $region33: #{tpu_custom_call.1} parent=1 // pred_fallthru
      _
    // Predicated region
    $region34: #{tpu_custom_call.1} parent=1 // pred_check
      _
    $region35: #{tpu_custom_call.1} parent=1 // pred_check_branch
      %123 = sbr.rel (0) target = $region37
    $region36: #{tpu_custom_call.1} parent=1 // pred_region
      %s125 = ssub.s32 256, 256
      %126 = vsyncadd [#allocation15], %s125
      %s127 = sshll.u32 [#allocation16], 4
      %s128 = int_to_ptr.vmem [resolvable:$true] %s127
      %133 = dma.hbm_to_vmem [thread:$0]  %s8, 256, %s128, [#allocation15], 128, 128, 8
    $region37: #{tpu_custom_call.1} parent=1 // pred_fallthru
      _
    // Predicated region
    $region38: #{tpu_custom_call.1} parent=1 // pred_check
      _
    $region39: #{tpu_custom_call.1} parent=1 // pred_check_branch
      %135 = sbr.rel (0) target = $region41
    $region40: #{tpu_custom_call.1} parent=1 // pred_region
      _
    $region41: #{tpu_custom_call.1} parent=1 // pred_fallthru
      _
    // Predicated region
    $region42: #{tpu_custom_call.1} parent=1 // pred_check
      _
    $region43: #{tpu_custom_call.1} parent=1 // pred_check_branch
      %137 = sbr.rel (0) target = $region45
    $region44: #{tpu_custom_call.1} parent=1 // pred_region
      %s139 = ssub.s32 256, 256
      %140 = vsyncadd [#allocation18], %s139
      %s141 = sshll.u32 [#allocation17], 4
      %s142 = int_to_ptr.vmem [resolvable:$true] %s141
      %147 = dma.hbm_to_vmem [thread:$0]  %s10, 256, %s142, [#allocation18], 128, 128, 8
    $region45: #{tpu_custom_call.1} parent=1 // pred_fallthru
      _
    // Predicated region
    $region46: #{tpu_custom_call.1} parent=1 // pred_check
      _
    $region47: #{tpu_custom_call.1} parent=1 // pred_check_branch
      %149 = sbr.rel (0) target = $region49
    $region48: #{tpu_custom_call.1} parent=1 // pred_region
      %s151 = ssub.s32 512, 512
      %152 = vsyncadd [#allocation18], %s151
      %s153 = sshll.u32 [#allocation19], 4
      %s154 = int_to_ptr.vmem [resolvable:$true] %s153
      %159 = dma.hbm_to_vmem [thread:$0]  %s11, 512, %s154, [#allocation18], 128, 128, 8
    $region49: #{tpu_custom_call.1} parent=1 // pred_fallthru
      _
    // Predicated region
    $region50: #{tpu_custom_call.1} parent=1 // pred_check
      _
    $region51: #{tpu_custom_call.1} parent=1 // pred_check_branch
      %161 = sbr.rel (0) target = $region53
    $region52: #{tpu_custom_call.1} parent=1 // pred_region
      _
    $region53: #{tpu_custom_call.1} parent=1 // pred_fallthru
      _
    // Predicated region
    $region54: #{tpu_custom_call.1} parent=1 // pred_check
      _
    $region55: #{tpu_custom_call.1} parent=1 // pred_check_branch
      %163 = sbr.rel (0) target = $region57
    $region56: #{tpu_custom_call.1} parent=1 // pred_region
      %s165 = ssub.s32 512, 512
      %166 = vsyncadd [#allocation21], %s165
      %s167 = sshll.u32 [#allocation20], 4
      %s168 = int_to_ptr.vmem [resolvable:$true] %s167
      %173 = dma.hbm_to_vmem [thread:$0]  %s13, 512, %s168, [#allocation21], 128, 128, 8
    $region57: #{tpu_custom_call.1} parent=1 // pred_fallthru
      _
    // Predicated region
    $region58: #{tpu_custom_call.1} parent=1 // pred_check
      _
    $region59: #{tpu_custom_call.1} parent=1 // pred_check_branch
      %175 = sbr.rel (0) target = $region61
    $region60: #{tpu_custom_call.1} parent=1 // pred_region
      _
    $region61: #{tpu_custom_call.1} parent=1 // pred_fallthru
      _
    // Predicated region
    $region62: #{tpu_custom_call.1} parent=1 // pred_check
      _
    $region63: #{tpu_custom_call.1} parent=1 // pred_check_branch
      %177 = sbr.rel (0) target = $region65
    $region64: #{tpu_custom_call.1} parent=1 // pred_region
      %178 = dma.done [#allocation3], 32
    $region65: #{tpu_custom_call.1} parent=1 // pred_fallthru
      _
    // Predicated region
    $region66: #{tpu_custom_call.1} parent=1 // pred_check
      _
    $region67: #{tpu_custom_call.1} parent=1 // pred_check_branch
      %180 = sbr.rel (0) target = $region69
    $region68: #{tpu_custom_call.1} parent=1 // pred_region
      %181 = dma.done [#allocation6], 32
    $region69: #{tpu_custom_call.1} parent=1 // pred_fallthru
      _
    // Predicated region
    $region70: #{tpu_custom_call.1} parent=1 // pred_check
      _
    $region71: #{tpu_custom_call.1} parent=1 // pred_check_branch
      %183 = sbr.rel (0) target = $region73
    $region72: #{tpu_custom_call.1} parent=1 // pred_region
      %184 = dma.done [#allocation6], 256
    $region73: #{tpu_custom_call.1} parent=1 // pred_fallthru
      _
    // Predicated region
    $region74: #{tpu_custom_call.1} parent=1 // pred_check
      _
    $region75: #{tpu_custom_call.1} parent=1 // pred_check_branch
      %186 = sbr.rel (0) target = $region77
    $region76: #{tpu_custom_call.1} parent=1 // pred_region
      %187 = dma.done [#allocation9], 256
    $region77: #{tpu_custom_call.1} parent=1 // pred_fallthru
      _
    // Predicated region
    $region78: #{tpu_custom_call.1} parent=1 // pred_check
      _
    $region79: #{tpu_custom_call.1} parent=1 // pred_check_branch
      %189 = sbr.rel (0) target = $region81
    $region80: #{tpu_custom_call.1} parent=1 // pred_region
      %190 = dma.done [#allocation9], 32
    $region81: #{tpu_custom_call.1} parent=1 // pred_fallthru
      _
    // Predicated region
    $region82: #{tpu_custom_call.1} parent=1 // pred_check
      _
    $region83: #{tpu_custom_call.1} parent=1 // pred_check_branch
      %192 = sbr.rel (0) target = $region85
    $region84: #{tpu_custom_call.1} parent=1 // pred_region
      %193 = dma.done [#allocation12], 64
    $region85: #{tpu_custom_call.1} parent=1 // pred_fallthru
      _
    // Predicated region
    $region86: #{tpu_custom_call.1} parent=1 // pred_check
      _
    $region87: #{tpu_custom_call.1} parent=1 // pred_check_branch
      %195 = sbr.rel (0) target = $region89
    $region88: #{tpu_custom_call.1} parent=1 // pred_region
      %196 = dma.done [#allocation12], 64
    $region89: #{tpu_custom_call.1} parent=1 // pred_fallthru
      _
    // Predicated region
    $region90: #{tpu_custom_call.1} parent=1 // pred_check
      _
    $region91: #{tpu_custom_call.1} parent=1 // pred_check_branch
      %198 = sbr.rel (0) target = $region93
    $region92: #{tpu_custom_call.1} parent=1 // pred_region
      %199 = dma.done [#allocation15], 512
    $region93: #{tpu_custom_call.1} parent=1 // pred_fallthru
      _
    // Predicated region
    $region94: #{tpu_custom_call.1} parent=1 // pred_check
      _
    $region95: #{tpu_custom_call.1} parent=1 // pred_check_branch
      %201 = sbr.rel (0) target = $region97
    $region96: #{tpu_custom_call.1} parent=1 // pred_region
      %202 = dma.done [#allocation15], 256
    $region97: #{tpu_custom_call.1} parent=1 // pred_fallthru
      _
    // Predicated region
    $region98: #{tpu_custom_call.1} parent=1 // pred_check
      _
    $region99: #{tpu_custom_call.1} parent=1 // pred_check_branch
      %204 = sbr.rel (0) target = $region101
    $region100: #{tpu_custom_call.1} parent=1 // pred_region
      %205 = dma.done [#allocation18], 256
    $region101: #{tpu_custom_call.1} parent=1 // pred_fallthru
      _
    // Predicated region
    $region102: #{tpu_custom_call.1} parent=1 // pred_check
      _
    $region103: #{tpu_custom_call.1} parent=1 // pred_check_branch
      %207 = sbr.rel (0) target = $region105
    $region104: #{tpu_custom_call.1} parent=1 // pred_region
      %208 = dma.done [#allocation18], 512
    $region105: #{tpu_custom_call.1} parent=1 // pred_fallthru
      _
    // Predicated region
    $region106: #{tpu_custom_call.1} parent=1 // pred_check
      _
    $region107: #{tpu_custom_call.1} parent=1 // pred_check_branch
      %210 = sbr.rel (0) target = $region109
    $region108: #{tpu_custom_call.1} parent=1 // pred_region
      %211 = dma.done [#allocation21], 512
    $region109: #{tpu_custom_call.1} parent=1 // pred_fallthru
      _
    %v212 = vld [vmem:[#allocation2] sm:$0x3]
    %v213 = vld [vmem:[#allocation11] sm:$0x3]
    %s214 = scalar_lea.vmem [#allocation11], 2
    %v215 = vld [vmem:[%s214] sm:$0x3]
    %v216 = vlaneseq
    %v217 = vand.u32 %v216, 127
    %vm218 = vcmp.ge.s32.totalorder %v217, 64
    %vm219 = vcmp.lt.s32.totalorder %v217, 96
    %vm220 = vmand %vm218, %vm219
    %v221 = vsel %vm220, 1.0, 0.5
    %v222 = vsel %vm220, 0.0, 0.5
    %v223 = vld [vmem:[#allocation14] sm:$0xff]
    %v224 = vld [vmem:[#allocation14 + $0x8] sm:$0xff]
    %v225 = vld [vmem:[#allocation14 + $0x10] sm:$0xff]
    %v226 = vld [vmem:[#allocation14 + $0x18] sm:$0xff]
    %vm227 = vcmask 130048
    %v229 = vsel %vm227, %v212, 0
    %231 = vmatprep.subr.mxu0 %v224
    %232 = vmatpush1.msra.mxu0 %v223
    %233 = vmatprep.subr.mxu0 %v226
    %234 = vmatpush1.msra.mxu0 %v225
    %235 = vmatprep.subr.mxu0 0.0
    %236 = vmatpush1.msra.mxu0 0.0
    %237 = vmatprep.subr.mxu0 0.0
    %238 = vmatpush1.msra.mxu0 0.0
    %239 = vmatprep.subr.mxu0 0.0
    %240 = vmatpush1.msra.mxu0 0.0
    %241 = vmatprep.subr.mxu0 0.0
    %242 = vmatpush1.msra.mxu0 0.0
    %243 = vmatprep.subr.mxu0 0.0
    %244 = vmatpush1.msra.mxu0 0.0
    %245 = vmatprep.subr.mxu0 0.0
    %246 = vmatpush1.msra.mxu0 0.0
    %247 = vmatprep.subr.mxu0 0.0
    %248 = vmatpush1.msra.mxu0 0.0
    %249 = vmatprep.subr.mxu0 0.0
    %250 = vmatpush1.msra.mxu0 0.0
    %251 = vmatprep.subr.mxu0 0.0
    %252 = vmatpush1.msra.mxu0 0.0
    %253 = vmatprep.subr.mxu0 0.0
    %254 = vmatpush1.msra.mxu0 0.0
    %255 = vmatprep.subr.mxu0 0.0
    %256 = vmatpush1.msra.mxu0 0.0
    %257 = vmatprep.subr.mxu0 0.0
    %258 = vmatpush1.msra.mxu0 0.0
    %259 = vmatprep.subr.mxu0 0.0
    %260 = vmatpush1.msra.mxu0 0.0
    %261 = vmatprep.subr.mxu0 0.0
    %262 = vmatpush1.msra.mxu0 0.0
    %263 = vmatprep.subr.mxu0 0.0
    %264 = vmatpush1.msra.mxu0 0.0
    %265 = vmatprep.subr.mxu0 0.0
    %266 = vmatpush1.msra.mxu0 0.0
    %267 = vmatprep.subr.mxu0 0.0
    %268 = vmatpush1.msra.mxu0 0.0
    %269 = vmatprep.subr.mxu0 0.0
    %270 = vmatpush1.msra.mxu0 0.0
    %271 = vmatprep.subr.mxu0 0.0
    %272 = vmatpush1.msra.mxu0 0.0
    %273 = vmatprep.subr.mxu0 0.0
    %274 = vmatpush1.msra.mxu0 0.0
    %275 = vmatprep.subr.mxu0 0.0
    %276 = vmatpush1.msra.mxu0 0.0
    %277 = vmatprep.subr.mxu0 0.0
    %278 = vmatpush1.msra.mxu0 0.0
    %279 = vmatprep.subr.mxu0 0.0
    %280 = vmatpush1.msra.mxu0 0.0
    %281 = vmatprep.subr.mxu0 0.0
    %282 = vmatpush1.msra.mxu0 0.0
    %283 = vmatprep.subr.mxu0 0.0
    %284 = vmatpush1.msra.mxu0 0.0
    %285 = vmatprep.subr.mxu0 0.0
    %286 = vmatpush1.msra.mxu0 0.0
    %287 = vmatprep.subr.mxu0 0.0
    %288 = vmatpush1.msra.mxu0 0.0
    %289 = vmatprep.subr.mxu0 0.0
    %290 = vmatpush1.msra.mxu0 0.0
    %291 = vmatprep.subr.mxu0 0.0
    %292 = vmatpush1.msra.mxu0 0.0
    %293 = vmatprep.subr.mxu0 0.0
    %294 = vmatpush1.msra.mxu0 0.0
    %295 = vmatprep.mubr.f32.mxu0 0.0
    %296 = vmatmul.mubr.f32.gmra.mrb[0].mxu0 %v229
    %v297 = vpop.f32.mrb[0].mxu0
    %v298 = vadd.f32 0.0, %v297
    %v299 = vpop.f32.mrb[0].mxu0
    %v300 = vadd.f32 0.0, %v299
    %301 = vdwg.mxu0
    %v302 = vld [vmem:[#allocation5] sm:$0x3]
    %v303 = vld [vmem:[#allocation16] sm:$0xff]
    %v304 = vld [vmem:[#allocation16 + $0x8] sm:$0xff]
    %v306 = vsel %vm227, %v302, 0
    %308 = vmatprep.subr.mxu0 0.0
    %309 = vmatpush1.msra.mxu0 %v303
    %310 = vmatprep.subr.mxu0 0.0
    %311 = vmatpush1.msra.mxu0 %v304
    %312 = vmatprep.subr.mxu0 0.0
    %313 = vmatpush1.msra.mxu0 0.0
    %314 = vmatprep.subr.mxu0 0.0
    %315 = vmatpush1.msra.mxu0 0.0
    %316 = vmatprep.subr.mxu0 0.0
    %317 = vmatpush1.msra.mxu0 0.0
    %318 = vmatprep.subr.mxu0 0.0
    %319 = vmatpush1.msra.mxu0 0.0
    %320 = vmatprep.subr.mxu0 0.0
    %321 = vmatpush1.msra.mxu0 0.0
    %322 = vmatprep.subr.mxu0 0.0
    %323 = vmatpush1.msra.mxu0 0.0
    %324 = vmatprep.subr.mxu0 0.0
    %325 = vmatpush1.msra.mxu0 0.0
    %326 = vmatprep.subr.mxu0 0.0
    %327 = vmatpush1.msra.mxu0 0.0
    %328 = vmatprep.subr.mxu0 0.0
    %329 = vmatpush1.msra.mxu0 0.0
    %330 = vmatprep.subr.mxu0 0.0
    %331 = vmatpush1.msra.mxu0 0.0
    %332 = vmatprep.subr.mxu0 0.0
    %333 = vmatpush1.msra.mxu0 0.0
    %334 = vmatprep.subr.mxu0 0.0
    %335 = vmatpush1.msra.mxu0 0.0
    %336 = vmatprep.subr.mxu0 0.0
    %337 = vmatpush1.msra.mxu0 0.0
    %338 = vmatprep.subr.mxu0 0.0
    %339 = vmatpush1.msra.mxu0 0.0
    %340 = vmatprep.subr.mxu0 0.0
    %341 = vmatpush1.msra.mxu0 0.0
    %342 = vmatprep.subr.mxu0 0.0
    %343 = vmatpush1.msra.mxu0 0.0
    %344 = vmatprep.subr.mxu0 0.0
    %345 = vmatpush1.msra.mxu0 0.0
    %346 = vmatprep.subr.mxu0 0.0
    %347 = vmatpush1.msra.mxu0 0.0
    %348 = vmatprep.subr.mxu0 0.0
    %349 = vmatpush1.msra.mxu0 0.0
    %350 = vmatprep.subr.mxu0 0.0
    %351 = vmatpush1.msra.mxu0 0.0
    %352 = vmatprep.subr.mxu0 0.0
    %353 = vmatpush1.msra.mxu0 0.0
    %354 = vmatprep.subr.mxu0 0.0
    %355 = vmatpush1.msra.mxu0 0.0
    %356 = vmatprep.subr.mxu0 0.0
    %357 = vmatpush1.msra.mxu0 0.0
    %358 = vmatprep.subr.mxu0 0.0
    %359 = vmatpush1.msra.mxu0 0.0
    %360 = vmatprep.subr.mxu0 0.0
    %361 = vmatpush1.msra.mxu0 0.0
    %362 = vmatprep.subr.mxu0 0.0
    %363 = vmatpush1.msra.mxu0 0.0
    %364 = vmatprep.subr.mxu0 0.0
    %365 = vmatpush1.msra.mxu0 0.0
    %366 = vmatprep.subr.mxu0 0.0
    %367 = vmatpush1.msra.mxu0 0.0
    %368 = vmatprep.subr.mxu0 0.0
    %369 = vmatpush1.msra.mxu0 0.0
    %370 = vmatprep.subr.mxu0 0.0
    %371 = vmatpush1.msra.mxu0 0.0
    %372 = vmatprep.mubr.f32.mxu0 0.0
    %373 = vmatmul.mubr.f32.gmra.mrb[0].mxu0 %v306
    %v374 = vpop.f32.mrb[0].mxu0
    %v375 = vadd.f32 0.0, %v374
    %v376 = vpop.f32.mrb[0].mxu0
    %377 = vdwg.mxu0
    %v378 = vadd.f32 %v298, %v375
    %v379 = vld [vmem:[%s9] sm:$0xff]
    %v380 = vld [vmem:[%s9 + $0x8] sm:$0xff]
    %v381 = vld [vmem:[%s9 + $0x10] sm:$0xff]
    %v382 = vld [vmem:[%s9 + $0x18] sm:$0xff]
    %vm383 = vcmask 261120
    %v385 = vsel %vm383, %v213, 0
    %387 = vmatprep.subr.mxu0 0.0
    %388 = vmatpush1.msra.mxu0 %v379
    %389 = vmatprep.subr.mxu0 0.0
    %390 = vmatpush1.msra.mxu0 %v380
    %391 = vmatprep.subr.mxu0 0.0
    %392 = vmatpush1.msra.mxu0 %v381
    %393 = vmatprep.subr.mxu0 0.0
    %394 = vmatpush1.msra.mxu0 %v382
    %395 = vmatprep.subr.mxu0 0.0
    %396 = vmatpush1.msra.mxu0 0.0
    %397 = vmatprep.subr.mxu0 0.0
    %398 = vmatpush1.msra.mxu0 0.0
    %399 = vmatprep.subr.mxu0 0.0
    %400 = vmatpush1.msra.mxu0 0.0
    %401 = vmatprep.subr.mxu0 0.0
    %402 = vmatpush1.msra.mxu0 0.0
    %403 = vmatprep.subr.mxu0 0.0
    %404 = vmatpush1.msra.mxu0 0.0
    %405 = vmatprep.subr.mxu0 0.0
    %406 = vmatpush1.msra.mxu0 0.0
    %407 = vmatprep.subr.mxu0 0.0
    %408 = vmatpush1.msra.mxu0 0.0
    %409 = vmatprep.subr.mxu0 0.0
    %410 = vmatpush1.msra.mxu0 0.0
    %411 = vmatprep.subr.mxu0 0.0
    %412 = vmatpush1.msra.mxu0 0.0
    %413 = vmatprep.subr.mxu0 0.0
    %414 = vmatpush1.msra.mxu0 0.0
    %415 = vmatprep.subr.mxu0 0.0
    %416 = vmatpush1.msra.mxu0 0.0
    %417 = vmatprep.subr.mxu0 0.0
    %418 = vmatpush1.msra.mxu0 0.0
    %419 = vmatprep.subr.mxu0 0.0
    %420 = vmatpush1.msra.mxu0 0.0
    %421 = vmatprep.subr.mxu0 0.0
    %422 = vmatpush1.msra.mxu0 0.0
    %423 = vmatprep.subr.mxu0 0.0
    %424 = vmatpush1.msra.mxu0 0.0
    %425 = vmatprep.subr.mxu0 0.0
    %426 = vmatpush1.msra.mxu0 0.0
    %427 = vmatprep.subr.mxu0 0.0
    %428 = vmatpush1.msra.mxu0 0.0
    %429 = vmatprep.subr.mxu0 0.0
    %430 = vmatpush1.msra.mxu0 0.0
    %431 = vmatprep.subr.mxu0 0.0
    %432 = vmatpush1.msra.mxu0 0.0
    %433 = vmatprep.subr.mxu0 0.0
    %434 = vmatpush1.msra.mxu0 0.0
    %435 = vmatprep.subr.mxu0 0.0
    %436 = vmatpush1.msra.mxu0 0.0
    %437 = vmatprep.subr.mxu0 0.0
    %438 = vmatpush1.msra.mxu0 0.0
    %439 = vmatprep.subr.mxu0 0.0
    %440 = vmatpush1.msra.mxu0 0.0
    %441 = vmatprep.subr.mxu0 0.0
    %442 = vmatpush1.msra.mxu0 0.0
    %443 = vmatprep.subr.mxu0 0.0
    %444 = vmatpush1.msra.mxu0 0.0
    %445 = vmatprep.subr.mxu0 0.0
    %446 = vmatpush1.msra.mxu0 0.0
    %447 = vmatprep.subr.mxu0 0.0
    %448 = vmatpush1.msra.mxu0 0.0
    %449 = vmatprep.subr.mxu0 0.0
    %450 = vmatpush1.msra.mxu0 0.0
    %451 = vmatprep.mubr.f32.mxu0 0.0
    %452 = vmatmul.mubr.f32.gmra.mrb[0].mxu0 %v385
    %v453 = vpop.f32.mrb[0].mxu0
    %v454 = vadd.f32 0.0, %v453
    %v455 = vpop.f32.mrb[0].mxu0
    %456 = vdwg.mxu0
    %v457 = vadd.f32 %v378, %v454
    %v458 = vld [vmem:[%s12] sm:$0x1]
    %v459 = vlaneseq
    %v460 = vshrl.u32 %v459, 7
    %v461 = vsub.s32 0, %v460
    %v462 = vrot.slane %v458, %v461
    %v463 = vadd.f32 %v457, %v462
    %v464 = vld [vmem:[#allocation13] sm:$0x3]
    %v465 = vmul.f32 %v463, %v221
    %v466 = vtanh.pop %v465
    %v467 = vmul.f32 %v221, %v466
    %v468 = vadd.f32 %v222, %v467
    %470 = vrot.lane.b32.xlu0 %v464, 32
    %v471 = vpop.permute.xlu0 %470
    %v473 = vmul.f32 %v468, %v471
    %475 = vrot.lane.b32.xlu0 %v468, 64
    %v476 = vpop.permute.xlu0 %475
    %v478 = vmul.f32 %v468, %v476
    %480 = vrot.lane.b32.xlu0 %v478, 32
    %v481 = vpop.permute.xlu0 %480
    %v483 = vadd.f32 %v473, %v481
    %v484 = vtanh.pop %v483
    %486 = vrot.lane.b32.xlu0 %v484, 64
    %v487 = vpop.permute.xlu0 %486
    %v489 = vmul.f32 %v468, %v487
    %v490 = vld [vmem:[#allocation20] sm:$0xff]
    %v491 = vld [vmem:[#allocation20 + $0x8] sm:$0xff]
    %v492 = vld [vmem:[#allocation20 + $0x10] sm:$0xff]
    %v493 = vld [vmem:[#allocation20 + $0x18] sm:$0xff]
    %v494 = vld [vmem:[%s14] sm:$0x1]
    %v495 = vlaneseq
    %v496 = vshrl.u32 %v495, 7
    %v497 = vsub.s32 0, %v496
    %v498 = vrot.slane %v494, %v497
    %v500 = vsel %vm383, %v215, 0
    %502 = vmatprep.subr.mxu0 0.0
    %503 = vmatpush1.msra.mxu0 %v490
    %504 = vmatprep.subr.mxu0 0.0
    %505 = vmatpush1.msra.mxu0 %v491
    %506 = vmatprep.subr.mxu0 0.0
    %507 = vmatpush1.msra.mxu0 %v492
    %508 = vmatprep.subr.mxu0 0.0
    %509 = vmatpush1.msra.mxu0 %v493
    %510 = vmatprep.subr.mxu0 0.0
    %511 = vmatpush1.msra.mxu0 0.0
    %512 = vmatprep.subr.mxu0 0.0
    %513 = vmatpush1.msra.mxu0 0.0
    %514 = vmatprep.subr.mxu0 0.0
    %515 = vmatpush1.msra.mxu0 0.0
    %516 = vmatprep.subr.mxu0 0.0
    %517 = vmatpush1.msra.mxu0 0.0
    %518 = vmatprep.subr.mxu0 0.0
    %519 = vmatpush1.msra.mxu0 0.0
    %520 = vmatprep.subr.mxu0 0.0
    %521 = vmatpush1.msra.mxu0 0.0
    %522 = vmatprep.subr.mxu0 0.0
    %523 = vmatpush1.msra.mxu0 0.0
    %524 = vmatprep.subr.mxu0 0.0
    %525 = vmatpush1.msra.mxu0 0.0
    %526 = vmatprep.subr.mxu0 0.0
    %527 = vmatpush1.msra.mxu0 0.0
    %528 = vmatprep.subr.mxu0 0.0
    %529 = vmatpush1.msra.mxu0 0.0
    %530 = vmatprep.subr.mxu0 0.0
    %531 = vmatpush1.msra.mxu0 0.0
    %532 = vmatprep.subr.mxu0 0.0
    %533 = vmatpush1.msra.mxu0 0.0
    %534 = vmatprep.subr.mxu0 0.0
    %535 = vmatpush1.msra.mxu0 0.0
    %536 = vmatprep.subr.mxu0 0.0
    %537 = vmatpush1.msra.mxu0 0.0
    %538 = vmatprep.subr.mxu0 0.0
    %539 = vmatpush1.msra.mxu0 0.0
    %540 = vmatprep.subr.mxu0 0.0
    %541 = vmatpush1.msra.mxu0 0.0
    %542 = vmatprep.subr.mxu0 0.0
    %543 = vmatpush1.msra.mxu0 0.0
    %544 = vmatprep.subr.mxu0 0.0
    %545 = vmatpush1.msra.mxu0 0.0
    %546 = vmatprep.subr.mxu0 0.0
    %547 = vmatpush1.msra.mxu0 0.0
    %548 = vmatprep.subr.mxu0 0.0
    %549 = vmatpush1.msra.mxu0 0.0
    %550 = vmatprep.subr.mxu0 0.0
    %551 = vmatpush1.msra.mxu0 0.0
    %552 = vmatprep.subr.mxu0 0.0
    %553 = vmatpush1.msra.mxu0 0.0
    %554 = vmatprep.subr.mxu0 0.0
    %555 = vmatpush1.msra.mxu0 0.0
    %556 = vmatprep.subr.mxu0 0.0
    %557 = vmatpush1.msra.mxu0 0.0
    %558 = vmatprep.subr.mxu0 0.0
    %559 = vmatpush1.msra.mxu0 0.0
    %560 = vmatprep.subr.mxu0 0.0
    %561 = vmatpush1.msra.mxu0 0.0
    %562 = vmatprep.subr.mxu0 0.0
    %563 = vmatpush1.msra.mxu0 0.0
    %564 = vmatprep.subr.mxu0 0.0
    %565 = vmatpush1.msra.mxu0 0.0
    %566 = vmatprep.mubr.f32.mxu0 0.0
    %567 = vmatmul.mubr.f32.gmra.mrb[0].mxu0 %v500
    %v568 = vpop.f32.mrb[0].mxu0
    %v569 = vadd.f32 %v498, %v568
    %v570 = vpop.f32.mrb[0].mxu0
    %571 = vdwg.mxu0
    %v572 = vld [vmem:[#allocation8] sm:$0xff]
    %v573 = vld [vmem:[#allocation8 + $0x8] sm:$0xff]
    %v576 = vunpack.c.l.s4 1966171168
    %v577 = vunpack.c.0.s8 %v576
    %v578 = vlaneseq
    %v579 = vshrl.u32 %v578, 7
    %v580 = vsub.s32 %v577, %v579
    %v581 = vrot.slane %v569, %v580
    %v582 = vcombine.high %v581, %v581
    %v584 = vunpack.c.l.s4 1966171168
    %v585 = vunpack.c.0.s8 %v584
    %v586 = vlaneseq
    %v587 = vshrl.u32 %v586, 7
    %v588 = vsub.s32 %v585, %v587
    %v589 = vrot.slane %v581, %v588
    %v591 = vunpack.c.l.s4 1966171168
    %v592 = vunpack.c.0.s8 %v591
    %v593 = vlaneseq
    %v594 = vshrl.u32 %v593, 7
    %v595 = vsub.s32 %v592, %v594
    %v596 = vrot.slane %v582, %v595
    %v597 = vlaneseq
    %v598 = vshrl.u32 %v597, 7
    %v599 = vsub.s32 0, %v598
    %v600 = vrot.slane %v589, %v599
    %v601 = vlaneseq
    %v602 = vshrl.u32 %v601, 7
    %v603 = vsub.s32 0, %v602
    %v604 = vrot.slane %v596, %v603
    %v607 = vadd.f32 %v572, %v600
    %v608 = vadd.f32 %v573, %v604
    %v609 = vtanh.pop %v607
    %v610 = vtanh.pop %v608
    %v611 = vld [vmem:[%s14 + $0x1] sm:$0x1]
    %v612 = vlaneseq
    %v613 = vshrl.u32 %v612, 7
    %v614 = vsub.s32 0, %v613
    %v615 = vrot.slane %v611, %v614
    %v616 = vmul.f32 %v609, %v615
    %v617 = vmul.f32 %v610, %v615
    %v618 = vsel %vm383, %v616, 0.0
    %619 = vadd.xlane.f32.xlu0 %v618
    %v620 = vpop.xlane.xlu0 %619
    %v621 = vsel %vm383, %v617, 0.0
    %622 = vadd.xlane.f32.xlu0 %v621
    %v623 = vpop.xlane.xlu0 %622
    %v624 = vld [vmem:[%s14 + $0x2] sm:$0x1]
    %s626 = vtos %v624
    %v627 = vstv %s626
    %v629 = vadd.f32 %v620, %v627
    %v630 = vadd.f32 %v623, %v627
    %v633 = vlaneseq
    %v634 = vshrl.u32 %v633, 7
    %v635 = vsub.s32 %v217, %v634
    %v636 = vrot.slane %v629, %v635
    %v637 = vlaneseq
    %v638 = vshrl.u32 %v637, 7
    %v639 = vsub.s32 %v217, %v638
    %v640 = vrot.slane %v630, %v639
    %vm641 = vcmask 1041409
    %v642 = vsel %vm641, %v640, %v636
    %vm644 = vcmask 58368
    %v645 = vsel %vm644, %v642, -inf
    %646 = vmax.xlane.f32.xlu0 %v645
    %v647 = vpop.xlane.xlu0 %646
    %v649 = vlaneseq
    %v650 = vshrl.u32 %v649, 7
    %v651 = vsub.s32 0, %v650
    %v652 = vrot.slane %v647, %v651
    %v653 = vlaneseq
    %v654 = vshrl.u32 %v653, 7
    %v655 = vsub.s32 1, %v654
    %v656 = vrot.slane %v647, %v655
    %v659 = vsub.f32 %v629, %v652
    %v660 = vsub.f32 %v630, %v656
    %v661 = vmul.f32 %v659, 1.442695
    %v662 = vpow.pop %v661
    %v663 = vmul.f32 %v660, 1.442695
    %v664 = vpow.pop %v663
    %v665 = vld [vmem:[#allocation10] sm:$0x3]
    %v667 = vlaneseq
    %v668 = vshrl.u32 %v667, 7
    %v669 = vsub.s32 0, %v668
    %v670 = vrot.slane %v665, %v669
    %672 = vbcast.lane.b32.xlu0 %v670, 256
    %v673 = vpop.permute.xlu0 %672
    %v674 = vlaneseq
    %v675 = vshrl.u32 %v674, 7
    %v676 = vsub.s32 1, %v675
    %v677 = vrot.slane %v665, %v676
    %679 = vbcast.lane.b32.xlu0 %v677, 256
    %v680 = vpop.permute.xlu0 %679
    %v683 = vmul.f32 %v662, %v673
    %v684 = vmul.f32 %v664, %v680
    %687 = vset.pattern.permute.xlu0 0
    %688 = vperm.xlu0 %687, %v683
    %v689 = vpop.permute.xlu0 %688
    %690 = vset.pattern.permute.xlu0 0
    %691 = vperm.xlu0 %690, %v684
    %v692 = vpop.permute.xlu0 %691
    %v693 = vlaneseq
    %v694 = vshrl.u32 %v693, 7
    %v695 = vsub.s32 %v217, %v694
    %v696 = vrot.slane %v689, %v695
    %v697 = vlaneseq
    %v698 = vshrl.u32 %v697, 7
    %v699 = vsub.s32 %v217, %v698
    %v700 = vrot.slane %v692, %v699
    %v701 = vsel %vm641, %v700, %v696
    %v703 = vsel %vm644, %v701, 0.0
    %704 = vadd.xlane.f32.xlu0 %v703
    %v705 = vpop.xlane.xlu0 %704
    %v706 = vrcp.pop %v705
    %v708 = vlaneseq
    %v709 = vshrl.u32 %v708, 7
    %v710 = vsub.s32 0, %v709
    %v711 = vrot.slane %v706, %v710
    %v712 = vlaneseq
    %v713 = vshrl.u32 %v712, 7
    %v714 = vsub.s32 1, %v713
    %v715 = vrot.slane %v706, %v714
    %v718 = vmul.f32 %v683, %v711
    %v719 = vmul.f32 %v684, %v715
    %v720 = vld [vmem:[#allocation7] sm:$0xff]
    %v721 = vld [vmem:[#allocation7 + $0x8] sm:$0xff]
    %723 = vset.pattern.permute.xlu0 0
    %724 = vperm.xlu0 %723, %v718
    %v725 = vpop.permute.xlu0 %724
    %728 = vset.pattern.permute.xlu0 0
    %729 = vperm.xlu0 %728, %v719
    %v730 = vpop.permute.xlu0 %729
    %v732 = vmul.f32 %v725, %v720
    %v733 = vmul.f32 %v730, %v721
    %v734 = vsel %vm227, %v732, 0.0
    %v735 = vrot.slane %v734, 4
    %v736 = vadd.f32 %v734, %v735
    %v737 = vrot.slane %v736, 2
    %v738 = vadd.f32 %v736, %v737
    %v739 = vrot.slane %v738, 1
    %v740 = vadd.f32 %v738, %v739
    %v741 = vsel %vm227, %v733, 0.0
    %v742 = vrot.slane %v741, 4
    %v743 = vadd.f32 %v741, %v742
    %v744 = vrot.slane %v743, 2
    %v745 = vadd.f32 %v743, %v744
    %v746 = vrot.slane %v745, 1
    %v747 = vadd.f32 %v745, %v746
    %v748 = vld [vmem:[#allocation17] sm:$0xff]
    %v749 = vld [vmem:[#allocation17 + $0x8] sm:$0xff]
    %v752 = vsel %vm641, %v747, %v740
    %v753 = vsel %vm227, %v752, 0
    %755 = vmatprep.subr.mxu0 0.0
    %756 = vmatpush1.msra.mxu0 %v748
    %757 = vmatprep.subr.mxu0 0.0
    %758 = vmatpush1.msra.mxu0 %v749
    %759 = vmatprep.subr.mxu0 0.0
    %760 = vmatpush1.msra.mxu0 0.0
    %761 = vmatprep.subr.mxu0 0.0
    %762 = vmatpush1.msra.mxu0 0.0
    %763 = vmatprep.subr.mxu0 0.0
    %764 = vmatpush1.msra.mxu0 0.0
    %765 = vmatprep.subr.mxu0 0.0
    %766 = vmatpush1.msra.mxu0 0.0
    %767 = vmatprep.subr.mxu0 0.0
    %768 = vmatpush1.msra.mxu0 0.0
    %769 = vmatprep.subr.mxu0 0.0
    %770 = vmatpush1.msra.mxu0 0.0
    %771 = vmatprep.subr.mxu0 0.0
    %772 = vmatpush1.msra.mxu0 0.0
    %773 = vmatprep.subr.mxu0 0.0
    %774 = vmatpush1.msra.mxu0 0.0
    %775 = vmatprep.subr.mxu0 0.0
    %776 = vmatpush1.msra.mxu0 0.0
    %777 = vmatprep.subr.mxu0 0.0
    %778 = vmatpush1.msra.mxu0 0.0
    %779 = vmatprep.subr.mxu0 0.0
    %780 = vmatpush1.msra.mxu0 0.0
    %781 = vmatprep.subr.mxu0 0.0
    %782 = vmatpush1.msra.mxu0 0.0
    %783 = vmatprep.subr.mxu0 0.0
    %784 = vmatpush1.msra.mxu0 0.0
    %785 = vmatprep.subr.mxu0 0.0
    %786 = vmatpush1.msra.mxu0 0.0
    %787 = vmatprep.subr.mxu0 0.0
    %788 = vmatpush1.msra.mxu0 0.0
    %789 = vmatprep.subr.mxu0 0.0
    %790 = vmatpush1.msra.mxu0 0.0
    %791 = vmatprep.subr.mxu0 0.0
    %792 = vmatpush1.msra.mxu0 0.0
    %793 = vmatprep.subr.mxu0 0.0
    %794 = vmatpush1.msra.mxu0 0.0
    %795 = vmatprep.subr.mxu0 0.0
    %796 = vmatpush1.msra.mxu0 0.0
    %797 = vmatprep.subr.mxu0 0.0
    %798 = vmatpush1.msra.mxu0 0.0
    %799 = vmatprep.subr.mxu0 0.0
    %800 = vmatpush1.msra.mxu0 0.0
    %801 = vmatprep.subr.mxu0 0.0
    %802 = vmatpush1.msra.mxu0 0.0
    %803 = vmatprep.subr.mxu0 0.0
    %804 = vmatpush1.msra.mxu0 0.0
    %805 = vmatprep.subr.mxu0 0.0
    %806 = vmatpush1.msra.mxu0 0.0
    %807 = vmatprep.subr.mxu0 0.0
    %808 = vmatpush1.msra.mxu0 0.0
    %809 = vmatprep.subr.mxu0 0.0
    %810 = vmatpush1.msra.mxu0 0.0
    %811 = vmatprep.subr.mxu0 0.0
    %812 = vmatpush1.msra.mxu0 0.0
    %813 = vmatprep.subr.mxu0 0.0
    %814 = vmatpush1.msra.mxu0 0.0
    %815 = vmatprep.subr.mxu0 0.0
    %816 = vmatpush1.msra.mxu0 0.0
    %817 = vmatprep.subr.mxu0 0.0
    %818 = vmatpush1.msra.mxu0 0.0
    %819 = vmatprep.mubr.f32.mxu0 0.0
    %820 = vmatmul.mubr.f32.gmra.mrb[0].mxu0 %v753
    %v821 = vpop.f32.mrb[0].mxu0
    %v822 = vadd.f32 0.0, %v821
    %v823 = vpop.f32.mrb[0].mxu0
    %824 = vdwg.mxu0
    %v825 = vadd.f32 %v300, %v822
    %v826 = vld [vmem:[#allocation19] sm:$0xff]
    %v827 = vld [vmem:[#allocation19 + $0x8] sm:$0xff]
    %v828 = vld [vmem:[#allocation19 + $0x10] sm:$0xff]
    %v829 = vld [vmem:[#allocation19 + $0x18] sm:$0xff]
    %830 = vmatprep.subr.mxu0 0.0
    %831 = vmatpush1.msra.mxu0 %v826
    %832 = vmatprep.subr.mxu0 0.0
    %833 = vmatpush1.msra.mxu0 %v827
    %834 = vmatprep.subr.mxu0 0.0
    %835 = vmatpush1.msra.mxu0 %v828
    %836 = vmatprep.subr.mxu0 0.0
    %837 = vmatpush1.msra.mxu0 %v829
    %838 = vmatprep.subr.mxu0 0.0
    %839 = vmatpush1.msra.mxu0 0.0
    %840 = vmatprep.subr.mxu0 0.0
    %841 = vmatpush1.msra.mxu0 0.0
    %842 = vmatprep.subr.mxu0 0.0
    %843 = vmatpush1.msra.mxu0 0.0
    %844 = vmatprep.subr.mxu0 0.0
    %845 = vmatpush1.msra.mxu0 0.0
    %846 = vmatprep.subr.mxu0 0.0
    %847 = vmatpush1.msra.mxu0 0.0
    %848 = vmatprep.subr.mxu0 0.0
    %849 = vmatpush1.msra.mxu0 0.0
    %850 = vmatprep.subr.mxu0 0.0
    %851 = vmatpush1.msra.mxu0 0.0
    %852 = vmatprep.subr.mxu0 0.0
    %853 = vmatpush1.msra.mxu0 0.0
    %854 = vmatprep.subr.mxu0 0.0
    %855 = vmatpush1.msra.mxu0 0.0
    %856 = vmatprep.subr.mxu0 0.0
    %857 = vmatpush1.msra.mxu0 0.0
    %858 = vmatprep.subr.mxu0 0.0
    %859 = vmatpush1.msra.mxu0 0.0
    %860 = vmatprep.subr.mxu0 0.0
    %861 = vmatpush1.msra.mxu0 0.0
    %862 = vmatprep.subr.mxu0 0.0
    %863 = vmatpush1.msra.mxu0 0.0
    %864 = vmatprep.subr.mxu0 0.0
    %865 = vmatpush1.msra.mxu0 0.0
    %866 = vmatprep.subr.mxu0 0.0
    %867 = vmatpush1.msra.mxu0 0.0
    %868 = vmatprep.subr.mxu0 0.0
    %869 = vmatpush1.msra.mxu0 0.0
    %870 = vmatprep.subr.mxu0 0.0
    %871 = vmatpush1.msra.mxu0 0.0
    %872 = vmatprep.subr.mxu0 0.0
    %873 = vmatpush1.msra.mxu0 0.0
    %874 = vmatprep.subr.mxu0 0.0
    %875 = vmatpush1.msra.mxu0 0.0
    %876 = vmatprep.subr.mxu0 0.0
    %877 = vmatpush1.msra.mxu0 0.0
    %878 = vmatprep.subr.mxu0 0.0
    %879 = vmatpush1.msra.mxu0 0.0
    %880 = vmatprep.subr.mxu0 0.0
    %881 = vmatpush1.msra.mxu0 0.0
    %882 = vmatprep.subr.mxu0 0.0
    %883 = vmatpush1.msra.mxu0 0.0
    %884 = vmatprep.subr.mxu0 0.0
    %885 = vmatpush1.msra.mxu0 0.0
    %886 = vmatprep.subr.mxu0 0.0
    %887 = vmatpush1.msra.mxu0 0.0
    %888 = vmatprep.subr.mxu0 0.0
    %889 = vmatpush1.msra.mxu0 0.0
    %890 = vmatprep.subr.mxu0 0.0
    %891 = vmatpush1.msra.mxu0 0.0
    %892 = vmatprep.subr.mxu0 0.0
    %893 = vmatpush1.msra.mxu0 0.0
    %894 = vmatprep.mubr.f32.mxu0 0.0
    %895 = vmatmul.mubr.f32.gmra.mrb[0].mxu0 %v500
    %v896 = vpop.f32.mrb[0].mxu0
    %v897 = vadd.f32 0.0, %v896
    %v898 = vpop.f32.mrb[0].mxu0
    %899 = vdwg.mxu0
    %v900 = vadd.f32 %v825, %v897
    %v901 = vld [vmem:[%s12 + $0x1] sm:$0x1]
    %v902 = vlaneseq
    %v903 = vshrl.u32 %v902, 7
    %v904 = vsub.s32 0, %v903
    %v905 = vrot.slane %v901, %v904
    %v906 = vadd.f32 %v900, %v905
    %s907 = scalar_lea.vmem [#allocation13], 2
    %v908 = vld [vmem:[%s907] sm:$0x3]
    %v909 = vmul.f32 %v906, %v221
    %v910 = vtanh.pop %v909
    %v911 = vmul.f32 %v221, %v910
    %v912 = vadd.f32 %v222, %v911
    %914 = vrot.lane.b32.xlu0 %v908, 32
    %v915 = vpop.permute.xlu0 %914
    %v917 = vmul.f32 %v912, %v915
    %919 = vrot.lane.b32.xlu0 %v912, 64
    %v920 = vpop.permute.xlu0 %919
    %v922 = vmul.f32 %v912, %v920
    %924 = vrot.lane.b32.xlu0 %v922, 32
    %v925 = vpop.permute.xlu0 %924
    %v927 = vadd.f32 %v917, %v925
    %v928 = vtanh.pop %v927
    %930 = vrot.lane.b32.xlu0 %v928, 64
    %v931 = vpop.permute.xlu0 %930
    %v933 = vmul.f32 %v912, %v931
    %935 = vrot.lane.b32.xlu0 %v489, 32
    %v936 = vpop.permute.xlu0 %935
    %vm938 = vcmask 254976
    %939 = vst.msk [vmem:[#allocation22] sm:$0x3] %vm938, %v936
    %941 = vrot.lane.b32.xlu0 %v933, 32
    %v942 = vpop.permute.xlu0 %941
    %s944 = scalar_lea.vmem [#allocation22], 2
    %945 = vst.msk [vmem:[%s944] sm:$0x3] %vm938, %v942
    %947 = vrot.lane.b32.xlu0 %v483, 96
    %v948 = vpop.permute.xlu0 %947
    %950 = vst.msk [vmem:[#allocation23] sm:$0x3] %vm938, %v948
    %952 = vrot.lane.b32.xlu0 %v927, 96
    %v953 = vpop.permute.xlu0 %952
    %s955 = scalar_lea.vmem [#allocation23], 2
    %956 = vst.msk [vmem:[%s955] sm:$0x3] %vm938, %v953
    %957 = vst.msk [vmem:[#allocation25] sm:$0x3] %vm938, %v936
    %958 = vrot.lane.b32.xlu0 %v933, 64
    %v959 = vpop.permute.xlu0 %958
    %vm961 = vcmask 517376
    %962 = vst.msk [vmem:[#allocation25] sm:$0x3] %vm961, %v959
    // Predicated region
    $region110: #{tpu_custom_call.1} parent=1 // pred_check
      _
    $region111: #{tpu_custom_call.1} parent=1 // pred_check_branch
      %964 = sbr.rel (0) target = $region113
    $region112: #{tpu_custom_call.1} parent=1 // pred_region
      %s966 = ssub.s32 64, 64
      %967 = vsyncadd [#allocation4], %s966
      %s968 = sshll.u32 [#allocation22], 4
      %s969 = int_to_ptr.vmem [resolvable:$true] %s968
      %974 = dma.vmem_to_hbm [thread:$0]  %s969, 64, %s15, [#allocation4], 32, 32, 2
    $region113: #{tpu_custom_call.1} parent=1 // pred_fallthru
      _
    // Predicated region
    $region114: #{tpu_custom_call.1} parent=1 // pred_check
      _
    $region115: #{tpu_custom_call.1} parent=1 // pred_check_branch
      %976 = sbr.rel (0) target = $region117
    $region116: #{tpu_custom_call.1} parent=1 // pred_region
      %s978 = ssub.s32 64, 64
      %979 = vsyncadd [#allocation24], %s978
      %s980 = sshll.u32 [#allocation23], 4
      %s981 = int_to_ptr.vmem [resolvable:$true] %s980
      %986 = dma.vmem_to_hbm [thread:$0]  %s981, 64, %s16, [#allocation24], 32, 32, 2
    $region117: #{tpu_custom_call.1} parent=1 // pred_fallthru
      _
    // Predicated region
    $region118: #{tpu_custom_call.1} parent=1 // pred_check
      _
    $region119: #{tpu_custom_call.1} parent=1 // pred_check_branch
      %988 = sbr.rel (0) target = $region121
    $region120: #{tpu_custom_call.1} parent=1 // pred_region
      %s990 = ssub.s32 32, 32
      %991 = vsyncadd [#allocation24], %s990
      %s993 = sshll.u32 [#allocation25], 4
      %s994 = int_to_ptr.vmem [resolvable:$true] %s993
      %996 = dma.vmem_to_hbm [thread:$0]  %s994, 32, %s17, [#allocation24]
    $region121: #{tpu_custom_call.1} parent=1 // pred_fallthru
      _
    // Predicated region
    $region122: #{tpu_custom_call.1} parent=1 // pred_check
      _
    $region123: #{tpu_custom_call.1} parent=1 // pred_check_branch
      %998 = sbr.rel (0) target = $region125
    $region124: #{tpu_custom_call.1} parent=1 // pred_region
      %999 = dma.done [#allocation4], 64
    $region125: #{tpu_custom_call.1} parent=1 // pred_fallthru
      _
    // Predicated region
    $region126: #{tpu_custom_call.1} parent=1 // pred_check
      _
    $region127: #{tpu_custom_call.1} parent=1 // pred_check_branch
      %1001 = sbr.rel (0) target = $region129
    $region128: #{tpu_custom_call.1} parent=1 // pred_region
      %1002 = dma.done [#allocation24], 64
    $region129: #{tpu_custom_call.1} parent=1 // pred_fallthru
      _
    // Predicated region
    $region130: #{tpu_custom_call.1} parent=1 // pred_check
      _
    $region131: #{tpu_custom_call.1} parent=1 // pred_check_branch
      %1004 = sbr.rel (0) target = $region133
    $region132: #{tpu_custom_call.1} parent=1 // pred_region
      %1005 = dma.done [#allocation24], 32
    $region133: #{tpu_custom_call.1} parent=1 // pred_fallthru
      _
    %1006 = vsyncpa [#allocation3], 1
    %1007 = vsyncpa [#allocation6], 1
    %1008 = vsyncpa [#allocation9], 1
    %1009 = vsyncpa [#allocation12], 1
    %1010 = vsyncpa [#allocation15], 1
    %1011 = vsyncpa [#allocation18], 1
    %1012 = vsyncpa [#allocation21], 1
    %1013 = vsyncpa [#allocation4], 1
    %1014 = vsyncpa [#allocation24], 1

</llo_original>
